<compile_context>
chip_gen: v7x
topology: tpu7x:2x2x1
jax: 0.10.0
libtpu: 0.0.40
codegen_flags: <defaults>
</compile_context>

<pallas_src>
import jax
import jax.numpy as jnp
from jax.experimental import pallas as pl
from jax.experimental.pallas import tpu as pltpu

HIDDEN = 64


def critic_kernel(x_ref, w1_ref, b1_ref, w2_ref, b2_ref, w3_ref, b3_ref, o_ref):
    # x_ref: (TR, g*obs_dim) f32 streamed tile -> cast to bf16 in-kernel.
    x = x_ref[...].astype(jnp.bfloat16)
    # Layer 1 (block-diag): Linear(obs_dim, 64) + ReLU, f32 accumulate.
    h1 = jnp.dot(x, w1_ref[...], preferred_element_type=jnp.float32)
    h1 = jnp.maximum(h1 + b1_ref[...], 0.0).astype(jnp.bfloat16)
    # Layer 2 (block-diag): Linear(64, 64) + ReLU.
    h2 = jnp.dot(h1, w2_ref[...], preferred_element_type=jnp.float32)
    h2 = jnp.maximum(h2 + b2_ref[...], 0.0).astype(jnp.bfloat16)
    # Layer 3 (block-diag): Linear(64, 1) + Tanh -> one value per packed batch row.
    v = jnp.dot(h2, w3_ref[...], preferred_element_type=jnp.float32)   # (TR, g)
    o_ref[...] = jnp.tanh(v + b3_ref[...])


def _choose_tile_rows(R, g, obs_dim, hidden, vmem_budget_bytes, max_rows_per_step):
    """Pick the packed-row tile TR from a VMEM budget (R = padded_batch // g)."""
    per_packed_row = (2 * g * obs_dim * 4      # double-buffered f32 obs stream
                      + 2 * g * 4              # double-buffered f32 output
                      + g * obs_dim * 2        # in-kernel bf16 copy of the obs tile
                      + 4 * g * hidden * 4     # f32 matmul results / temporaries
                      + 2 * g * hidden * 2)    # bf16 activations
    tr = int(vmem_budget_bytes) // per_packed_row
    tr = min(tr, max(1, 8192 // g))            # cap batch tile at ~8192 rows/step
    if max_rows_per_step is not None:
        tr = min(tr, max(1, int(max_rows_per_step) // g))
    tr = max(8, (tr // 8) * 8)                 # sublane-aligned packed-row blocks
    if tr >= R:
        if R >= 16:
            # Whole batch fits in one tile: split in two so both v7x TensorCores
            # get a grid step to execute ("parallel" batch axis).
            tr = ((pl.cdiv(R, 2) + 7) // 8) * 8
        else:
            tr = R                             # tiny batch: single full block
    return tr


def critic_forward(obs, params, *, group=8, vmem_budget_bytes=10 << 20,
                   max_rows_per_step=None):
    """obs: (B, obs_dim) float32 -> (B,) float32 (matches torch.squeeze(..., -1))."""
    w1, b1, w2, b2, w3, b3 = params
    B, obs_dim = obs.shape
    hidden = w1.shape[1]
    g = max(1, int(group))

    # Pack g batch rows per wide row. Pad by < g zero rows only when B % g != 0
    # (typical PPO batch sizes are multiples of g, so this is usually a no-op).
    R = pl.cdiv(B, g)
    Bp = R * g
    if Bp != B:
        obs = jnp.pad(obs, ((0, Bp - B), (0, 0)))
    x = obs.reshape(R, g * obs_dim)            # contiguous dim merge -> no data movement

    # Resident block-diagonal weights (bf16) and tiled biases (f32).
    eye = jnp.eye(g, dtype=jnp.float32)
    w1_bd = jnp.kron(eye, w1.astype(jnp.float32)).astype(jnp.bfloat16)   # (g*obs, g*64)
    w2_bd = jnp.kron(eye, w2.astype(jnp.float32)).astype(jnp.bfloat16)   # (g*64, g*64)
    w3_bd = jnp.kron(eye, w3.astype(jnp.float32)).astype(jnp.bfloat16)   # (g*64, g)
    b1_bd = jnp.tile(b1.reshape(1, hidden), (1, g)).astype(jnp.float32)  # (1, g*64)
    b2_bd = jnp.tile(b2.reshape(1, hidden), (1, g)).astype(jnp.float32)  # (1, g*64)
    b3_bd = jnp.tile(b3.reshape(1, 1), (1, g)).astype(jnp.float32)       # (1, g)

    TR = _choose_tile_rows(R, g, obs_dim, hidden, vmem_budget_bytes, max_rows_per_step)
    n_tiles = pl.cdiv(R, TR)                   # last block may be ragged; Pallas masks it

    flops = 2 * B * (obs_dim * hidden + hidden * hidden + hidden)
    bytes_accessed = (B * obs_dim * 4 + Bp * 4
                      + (w1_bd.size + w2_bd.size + w3_bd.size) * 2
                      + (b1_bd.size + b2_bd.size + b3_bd.size) * 4)
    cost = pl.CostEstimate(flops=flops, transcendentals=B,
                           bytes_accessed=bytes_accessed)

    def resident(a):                           # constant index_map: stays in VMEM
        return pl.BlockSpec(a.shape, lambda i, _nd=a.ndim: (0,) * _nd)

    out = pl.pallas_call(
        critic_kernel,
        out_shape=jax.ShapeDtypeStruct((R, g), jnp.float32),
        grid=(n_tiles,),
        in_specs=[
            pl.BlockSpec((TR, g * obs_dim), lambda i: (i, 0)),   # obs: streamed f32
            resident(w1_bd), resident(b1_bd),
            resident(w2_bd), resident(b2_bd),
            resident(w3_bd), resident(b3_bd),
        ],
        out_specs=pl.BlockSpec((TR, g), lambda i: (i, 0)),
        compiler_params=pltpu.CompilerParams(
            dimension_semantics=("parallel",),
            vmem_limit_bytes=32 * 1024 * 1024),
        cost_estimate=cost,
    )(x, w1_bd, b1_bd, w2_bd, b2_bd, w3_bd, b3_bd)

    # (R, g) -> (Bp,) is a contiguous row-major merge; drop any pad rows.
    return out.reshape(Bp)[:B]


def init_params(key, obs_dim, hidden=HIDDEN):
    """Deterministic init mimicking nn.Linear default (uniform +/- 1/sqrt(fan_in))."""
    def linear(k, fan_in, fan_out):
        kw, kb = jax.random.split(k)
        bound = 1.0 / jnp.sqrt(fan_in)
        w = jax.random.uniform(kw, (fan_in, fan_out), jnp.float32, -bound, bound)
        b = jax.random.uniform(kb, (1, fan_out), jnp.float32, -bound, bound)
        return w, b

    k1, k2, k3 = jax.random.split(key, 3)
    w1, b1 = linear(k1, obs_dim, hidden)
    w2, b2 = linear(k2, hidden, hidden)
    w3, b3 = linear(k3, hidden, 1)
    return (w1, b1, w2, b2, w3, b3)


def _reference(obs, params):
    """Plain-JAX reference using the same bf16 input/weight/activation quantization."""
    w1, b1, w2, b2, w3, b3 = params
    f32 = lambda a: a.astype(jnp.bfloat16).astype(jnp.float32)
    h1 = jnp.maximum(f32(obs) @ f32(w1) + b1, 0.0)
    h2 = jnp.maximum(f32(h1) @ f32(w2) + b2, 0.0)
    v = f32(h2) @ f32(w3) + b3
    return jnp.squeeze(jnp.tanh(v), axis=-1)


if __name__ == "__main__":
    key = jax.random.PRNGKey(0)
    k_obs, k_obs2, k_params = jax.random.split(key, 3)

    B, OBS_DIM = 8, 32
    obs = jax.random.normal(k_obs, (B, OBS_DIM), dtype=jnp.float32)
    params = init_params(k_params, OBS_DIM)

    values = critic_forward(obs, params)
    jax.block_until_ready(values)
    ref = _reference(obs, params)
    assert values.shape == (B,)
    assert jnp.allclose(values, ref, atol=1e-3, rtol=1e-3)

    # B not a multiple of the packing group (exercises the <g-row pad) plus a forced
    # small tile so the grid has several steps and a ragged (masked) last block.
    B2 = 300
    obs2 = jax.random.normal(k_obs2, (B2, OBS_DIM), dtype=jnp.float32)
    values2 = critic_forward(obs2, params, max_rows_per_step=128)
    jax.block_until_ready(values2)
    ref2 = _reference(obs2, params)
    assert values2.shape == (B2,)
    assert jnp.allclose(values2, ref2, atol=1e-3, rtol=1e-3)

    # Default path: VMEM-budgeted tile with the split-in-two (megacore) fallback.
    values3 = critic_forward(obs2, params)
    jax.block_until_ready(values3)
    assert jnp.allclose(values3, ref2, atol=1e-3, rtol=1e-3)

    print("KERNEL_OK")
</pallas_src>

<mosaic_0001>
module attributes {stable_mosaic.version = 11 : i64} {
  func.func @critic_kernel(%arg0: i32, %arg1: memref<1x256xf32, #tpu.memory_space<vmem>>, %arg2: memref<256x512xbf16, #tpu.memory_space<vmem>>, %arg3: memref<1x512xf32, #tpu.memory_space<vmem>>, %arg4: memref<512x512xbf16, #tpu.memory_space<vmem>>, %arg5: memref<1x512xf32, #tpu.memory_space<vmem>>, %arg6: memref<512x8xbf16, #tpu.memory_space<vmem>>, %arg7: memref<1x8xf32, #tpu.memory_space<vmem>>, %arg8: memref<1x8xf32, #tpu.memory_space<vmem>>) attributes {dimension_semantics = [#tpu.dimension_semantics<parallel>], iteration_bounds = array<i64: 1>, scalar_prefetch = 0 : i64, scratch_operands = 0 : i64, tpu.core_type = #tpu.core_type<tc>, window_params = [{transform_indices = @transform_0, window_bounds = array<i64: 1, 256>}, {pipeline_mode = #tpu.pipeline_mode<synchronous>, transform_indices = @transform_1, window_bounds = array<i64: 256, 512>}, {pipeline_mode = #tpu.pipeline_mode<synchronous>, transform_indices = @transform_2, window_bounds = array<i64: 1, 512>}, {pipeline_mode = #tpu.pipeline_mode<synchronous>, transform_indices = @transform_3, window_bounds = array<i64: 512, 512>}, {pipeline_mode = #tpu.pipeline_mode<synchronous>, transform_indices = @transform_4, window_bounds = array<i64: 1, 512>}, {pipeline_mode = #tpu.pipeline_mode<synchronous>, transform_indices = @transform_5, window_bounds = array<i64: 512, 8>}, {pipeline_mode = #tpu.pipeline_mode<synchronous>, transform_indices = @transform_6, window_bounds = array<i64: 1, 8>}, {transform_indices = @transform_7, window_bounds = array<i64: 1, 8>}]} {
    %c0 = arith.constant 0 : index
    %c0_0 = arith.constant 0 : index
    %0 = vector.load %arg1[%c0, %c0_0] : memref<1x256xf32, #tpu.memory_space<vmem>>, vector<1x256xf32>
    %1 = arith.truncf %0 : vector<1x256xf32> to vector<1x256xbf16>
    %c0_1 = arith.constant 0 : index
    %c0_2 = arith.constant 0 : index
    %2 = vector.load %arg2[%c0_1, %c0_2] : memref<256x512xbf16, #tpu.memory_space<vmem>>, vector<256x512xbf16>
    %cst = arith.constant dense<0.000000e+00> : vector<1x512xf32>
    %3 = tpu.matmul %1, %2, %cst {dimension_numbers = #tpu.dot_dimension_numbers<[1], [0], [0], [1], [0, 0, 1, 1], [], []>} : vector<1x256xbf16>, vector<256x512xbf16>, vector<1x512xf32> -> vector<1x512xf32>
    %c0_3 = arith.constant 0 : index
    %c0_4 = arith.constant 0 : index
    %4 = vector.load %arg3[%c0_3, %c0_4] : memref<1x512xf32, #tpu.memory_space<vmem>>, vector<1x512xf32>
    %5 = arith.addf %3, %4 : vector<1x512xf32>
    %cst_5 = arith.constant 0.000000e+00 : f32
    %6 = vector.broadcast %cst_5 : f32 to vector<1x512xf32>
    %7 = arith.maximumf %5, %6 : vector<1x512xf32>
    %8 = arith.truncf %7 : vector<1x512xf32> to vector<1x512xbf16>
    %c0_6 = arith.constant 0 : index
    %c0_7 = arith.constant 0 : index
    %9 = vector.load %arg4[%c0_6, %c0_7] : memref<512x512xbf16, #tpu.memory_space<vmem>>, vector<512x512xbf16>
    %cst_8 = arith.constant dense<0.000000e+00> : vector<1x512xf32>
    %10 = tpu.matmul %8, %9, %cst_8 {dimension_numbers = #tpu.dot_dimension_numbers<[1], [0], [0], [1], [0, 0, 1, 1], [], []>} : vector<1x512xbf16>, vector<512x512xbf16>, vector<1x512xf32> -> vector<1x512xf32>
    %c0_9 = arith.constant 0 : index
    %c0_10 = arith.constant 0 : index
    %11 = vector.load %arg5[%c0_9, %c0_10] : memref<1x512xf32, #tpu.memory_space<vmem>>, vector<1x512xf32>
    %12 = arith.addf %10, %11 : vector<1x512xf32>
    %cst_11 = arith.constant 0.000000e+00 : f32
    %13 = vector.broadcast %cst_11 : f32 to vector<1x512xf32>
    %14 = arith.maximumf %12, %13 : vector<1x512xf32>
    %15 = arith.truncf %14 : vector<1x512xf32> to vector<1x512xbf16>
    %c0_12 = arith.constant 0 : index
    %c0_13 = arith.constant 0 : index
    %16 = vector.load %arg6[%c0_12, %c0_13] : memref<512x8xbf16, #tpu.memory_space<vmem>>, vector<512x8xbf16>
    %cst_14 = arith.constant dense<0.000000e+00> : vector<1x8xf32>
    %17 = tpu.matmul %15, %16, %cst_14 {dimension_numbers = #tpu.dot_dimension_numbers<[1], [0], [0], [1], [0, 0, 1, 1], [], []>} : vector<1x512xbf16>, vector<512x8xbf16>, vector<1x8xf32> -> vector<1x8xf32>
    %c0_15 = arith.constant 0 : index
    %c0_16 = arith.constant 0 : index
    %18 = vector.load %arg7[%c0_15, %c0_16] : memref<1x8xf32, #tpu.memory_space<vmem>>, vector<1x8xf32>
    %19 = arith.addf %17, %18 : vector<1x8xf32>
    %20 = math.tanh %19 : vector<1x8xf32>
    %c0_17 = arith.constant 0 : index
    %c0_18 = arith.constant 0 : index
    %21 = vector.load %arg8[%c0_17, %c0_18] : memref<1x8xf32, #tpu.memory_space<vmem>>, vector<1x8xf32>
    tpu.vector_store %arg8[%c0_17, %c0_18], %20 {strides = array<i32>} : memref<1x8xf32, #tpu.memory_space<vmem>>, vector<1x8xf32>,
    return
  }
  func.func @transform_0(%arg0: i32) -> (i32, i32) {
    %c0_i32 = arith.constant 0 : i32
    %c0_i32_0 = arith.constant 0 : i32
    return %arg0, %c0_i32 : i32, i32
  }
  func.func @transform_1(%arg0: i32) -> (i32, i32) {
    %c0_i32 = arith.constant 0 : i32
    %c0_i32_0 = arith.constant 0 : i32
    %c0_i32_1 = arith.constant 0 : i32
    return %c0_i32, %c0_i32_0 : i32, i32
  }
  func.func @transform_2(%arg0: i32) -> (i32, i32) {
    %c0_i32 = arith.constant 0 : i32
    %c0_i32_0 = arith.constant 0 : i32
    %c0_i32_1 = arith.constant 0 : i32
    return %c0_i32, %c0_i32_0 : i32, i32
  }
  func.func @transform_3(%arg0: i32) -> (i32, i32) {
    %c0_i32 = arith.constant 0 : i32
    %c0_i32_0 = arith.constant 0 : i32
    %c0_i32_1 = arith.constant 0 : i32
    return %c0_i32, %c0_i32_0 : i32, i32
  }
  func.func @transform_4(%arg0: i32) -> (i32, i32) {
    %c0_i32 = arith.constant 0 : i32
    %c0_i32_0 = arith.constant 0 : i32
    %c0_i32_1 = arith.constant 0 : i32
    return %c0_i32, %c0_i32_0 : i32, i32
  }
  func.func @transform_5(%arg0: i32) -> (i32, i32) {
    %c0_i32 = arith.constant 0 : i32
    %c0_i32_0 = arith.constant 0 : i32
    %c0_i32_1 = arith.constant 0 : i32
    return %c0_i32, %c0_i32_0 : i32, i32
  }
  func.func @transform_6(%arg0: i32) -> (i32, i32) {
    %c0_i32 = arith.constant 0 : i32
    %c0_i32_0 = arith.constant 0 : i32
    %c0_i32_1 = arith.constant 0 : i32
    return %c0_i32, %c0_i32_0 : i32, i32
  }
  func.func @transform_7(%arg0: i32) -> (i32, i32) {
    %c0_i32 = arith.constant 0 : i32
    %c0_i32_0 = arith.constant 0 : i32
    return %arg0, %c0_i32 : i32, i32
  }
}

</mosaic_0001>

<llo_original>
// kernel: tpu_custom_call.1
$region0: #{tpu_custom_call.1}
  #allocation0 [shape = 'u32[]', space=smem, size = 0x4, offset = 0x4, fixed_abs, tag = 'smem constant byte address 0x4 - core index']
  #allocation1 [shape = 'u32[144,128]{1,0:T(1,128)}', space=vmem, size = 0x12000, scoped, tag = 'internal scratch']
  %s0 = inlined_call_operand.vmem [shape: f32[1,256], index: 0, kind: input, shape index: {}]
  %s1 = inlined_call_operand.hbm [shape: bf16[256,512], index: 1, kind: input, shape index: {}]
  %s2 = inlined_call_operand.vmem [shape: f32[1,512], index: 2, kind: input, shape index: {}]
  %s3 = inlined_call_operand.hbm [shape: bf16[512,512], index: 3, kind: input, shape index: {}]
  %s4 = inlined_call_operand.vmem [shape: f32[1,512], index: 4, kind: input, shape index: {}]
  %s5 = inlined_call_operand.vmem [shape: bf16[512,8], index: 5, kind: input, shape index: {}]
  %s6 = inlined_call_operand.vmem [shape: f32[1,8], index: 6, kind: input, shape index: {}]
  %s7 = inlined_call_operand.hbm [shape: f32[1,8], index: 7, kind: output, shape index: {}]
  %s8 = sld [smem:[#allocation0]]
  $region46: #{tpu_custom_call.1} parent=0
    _
  %s10 = ssub.s32 1, %s8
  %s11 = scalar_select 0, %s10, %s8
  $region1: #{tpu_custom_call.1} parent=0
    #allocation2 [shape = 'u8[262144]{0}', space=vmem, size = 0x40000, scoped, tag = 'input window, operand 1, single buffered']
    #allocation3 [shape = 's32[1]{0}', space=sflag, size = 0x4, scoped, tag = 'scoped memory for tpu_custom_call.1']
    #allocation4 [shape = 's32[1]{0}', space=sflag, size = 0x4, scoped, tag = 'scoped memory for tpu_custom_call.1']
    #allocation5 [shape = 'u8[524288]{0}', space=vmem, size = 0x80000, scoped, tag = 'input window, operand 3, single buffered']
    #allocation6 [shape = 's32[1]{0}', space=sflag, size = 0x4, scoped, tag = 'scoped memory for tpu_custom_call.1']
    #allocation7 [shape = 'u8[512]{0}', space=vmem, size = 0x400, scoped, tag = 'output window, operand 0, single buffered']
    %12 = vsyncpa [#allocation3], 0
    %13 = vsyncpa [#allocation6], 0
    %14 = vsyncpa [#allocation4], 0
    // Predicated region
    $region2: #{tpu_custom_call.1} parent=1 // pred_check
      _
    $region3: #{tpu_custom_call.1} parent=1 // pred_check_branch
      %16 = sbr.rel (0) target = $region5
    $region4: #{tpu_custom_call.1} parent=1 // pred_region
      _
    $region5: #{tpu_custom_call.1} parent=1 // pred_fallthru
      _
    // Predicated region
    $region6: #{tpu_custom_call.1} parent=1 // pred_check
      _
    $region7: #{tpu_custom_call.1} parent=1 // pred_check_branch
      %18 = sbr.rel (0) target = $region9
    $region8: #{tpu_custom_call.1} parent=1 // pred_region
      %s20 = ssub.s32 8192, 8192
      %21 = vsyncadd [#allocation3], %s20
      %s22 = sshll.u32 [#allocation2], 4
      %s23 = int_to_ptr.vmem [resolvable:$true] %s22
      %28 = dma.hbm_to_vmem [thread:$0]  %s1, 8192, %s23, [#allocation3], 256, 256, 16
    $region9: #{tpu_custom_call.1} parent=1 // pred_fallthru
      _
    // Predicated region
    $region10: #{tpu_custom_call.1} parent=1 // pred_check
      _
    $region11: #{tpu_custom_call.1} parent=1 // pred_check_branch
      %30 = sbr.rel (0) target = $region13
    $region12: #{tpu_custom_call.1} parent=1 // pred_region
      _
    $region13: #{tpu_custom_call.1} parent=1 // pred_fallthru
      _
    // Predicated region
    $region14: #{tpu_custom_call.1} parent=1 // pred_check
      _
    $region15: #{tpu_custom_call.1} parent=1 // pred_check_branch
      %32 = sbr.rel (0) target = $region17
    $region16: #{tpu_custom_call.1} parent=1 // pred_region
      %s34 = ssub.s32 16384, 16384
      %35 = vsyncadd [#allocation6], %s34
      %s36 = sshll.u32 [#allocation5], 4
      %s37 = int_to_ptr.vmem [resolvable:$true] %s36
      %42 = dma.hbm_to_vmem [thread:$0]  %s3, 16384, %s37, [#allocation6], 256, 256, 16
    $region17: #{tpu_custom_call.1} parent=1 // pred_fallthru
      _
    // Predicated region
    $region18: #{tpu_custom_call.1} parent=1 // pred_check
      _
    $region19: #{tpu_custom_call.1} parent=1 // pred_check_branch
      %44 = sbr.rel (0) target = $region21
    $region20: #{tpu_custom_call.1} parent=1 // pred_region
      _
    $region21: #{tpu_custom_call.1} parent=1 // pred_fallthru
      _
    // Predicated region
    $region22: #{tpu_custom_call.1} parent=1 // pred_check
      _
    $region23: #{tpu_custom_call.1} parent=1 // pred_check_branch
      %46 = sbr.rel (0) target = $region25
    $region24: #{tpu_custom_call.1} parent=1 // pred_region
      _
    $region25: #{tpu_custom_call.1} parent=1 // pred_fallthru
      _
    // Predicated region
    $region26: #{tpu_custom_call.1} parent=1 // pred_check
      _
    $region27: #{tpu_custom_call.1} parent=1 // pred_check_branch
      %48 = sbr.rel (0) target = $region29
    $region28: #{tpu_custom_call.1} parent=1 // pred_region
      _
    $region29: #{tpu_custom_call.1} parent=1 // pred_fallthru
      _
    // Predicated region
    $region30: #{tpu_custom_call.1} parent=1 // pred_check
      _
    $region31: #{tpu_custom_call.1} parent=1 // pred_check_branch
      %50 = sbr.rel (0) target = $region33
    $region32: #{tpu_custom_call.1} parent=1 // pred_region
      %51 = dma.done [#allocation3], 8192
    $region33: #{tpu_custom_call.1} parent=1 // pred_fallthru
      _
    // Predicated region
    $region34: #{tpu_custom_call.1} parent=1 // pred_check
      _
    $region35: #{tpu_custom_call.1} parent=1 // pred_check_branch
      %53 = sbr.rel (0) target = $region37
    $region36: #{tpu_custom_call.1} parent=1 // pred_region
      %54 = dma.done [#allocation6], 16384
    $region37: #{tpu_custom_call.1} parent=1 // pred_fallthru
      _
    %v56 = vld [vmem:[%s0] sm:$0x3]
    %v58 = vlaneseq
    %v59 = vshrl.u32 %v58, 7
    %v60 = vsub.s32 0, %v59
    %v61 = vrot.slane %v56, %v60
    %v62 = vlaneseq
    %v63 = vshrl.u32 %v62, 7
    %v64 = vsub.s32 1, %v63
    %v65 = vrot.slane %v56, %v64
    %v68 = vpack.c.bf16 %v61, %v61
    %v69 = vpack.c.bf16 %v65, %v65
    %v70 = vld [vmem:[#allocation2] sm:$0xff]
    %v71 = vld [vmem:[#allocation2 + $0x8] sm:$0xff]
    %v72 = vld [vmem:[#allocation2 + $0x10] sm:$0xff]
    %v73 = vld [vmem:[#allocation2 + $0x18] sm:$0xff]
    %v74 = vld [vmem:[#allocation2 + $0x20] sm:$0xff]
    %v75 = vld [vmem:[#allocation2 + $0x28] sm:$0xff]
    %v76 = vld [vmem:[#allocation2 + $0x30] sm:$0xff]
    %v77 = vld [vmem:[#allocation2 + $0x38] sm:$0xff]
    %v78 = vld [vmem:[#allocation2 + $0x40] sm:$0xff]
    %v79 = vld [vmem:[#allocation2 + $0x48] sm:$0xff]
    %v80 = vld [vmem:[#allocation2 + $0x50] sm:$0xff]
    %v81 = vld [vmem:[#allocation2 + $0x58] sm:$0xff]
    %v82 = vld [vmem:[#allocation2 + $0x60] sm:$0xff]
    %v83 = vld [vmem:[#allocation2 + $0x68] sm:$0xff]
    %v84 = vld [vmem:[#allocation2 + $0x70] sm:$0xff]
    %v85 = vld [vmem:[#allocation2 + $0x78] sm:$0xff]
    %v86 = vld [vmem:[#allocation2 + $0x80] sm:$0xff]
    %v87 = vld [vmem:[#allocation2 + $0x88] sm:$0xff]
    %v88 = vld [vmem:[#allocation2 + $0x90] sm:$0xff]
    %v89 = vld [vmem:[#allocation2 + $0x98] sm:$0xff]
    %v90 = vld [vmem:[#allocation2 + $0xa0] sm:$0xff]
    %v91 = vld [vmem:[#allocation2 + $0xa8] sm:$0xff]
    %v92 = vld [vmem:[#allocation2 + $0xb0] sm:$0xff]
    %v93 = vld [vmem:[#allocation2 + $0xb8] sm:$0xff]
    %v94 = vld [vmem:[#allocation2 + $0xc0] sm:$0xff]
    %v95 = vld [vmem:[#allocation2 + $0xc8] sm:$0xff]
    %v96 = vld [vmem:[#allocation2 + $0xd0] sm:$0xff]
    %v97 = vld [vmem:[#allocation2 + $0xd8] sm:$0xff]
    %v98 = vld [vmem:[#allocation2 + $0xe0] sm:$0xff]
    %v99 = vld [vmem:[#allocation2 + $0xe8] sm:$0xff]
    %v100 = vld [vmem:[#allocation2 + $0xf0] sm:$0xff]
    %v101 = vld [vmem:[#allocation2 + $0xf8] sm:$0xff]
    %v102 = vld [vmem:[#allocation2 + $0x100] sm:$0xff]
    %v103 = vld [vmem:[#allocation2 + $0x108] sm:$0xff]
    %v104 = vld [vmem:[#allocation2 + $0x110] sm:$0xff]
    %v105 = vld [vmem:[#allocation2 + $0x118] sm:$0xff]
    %v106 = vld [vmem:[#allocation2 + $0x120] sm:$0xff]
    %v107 = vld [vmem:[#allocation2 + $0x128] sm:$0xff]
    %v108 = vld [vmem:[#allocation2 + $0x130] sm:$0xff]
    %v109 = vld [vmem:[#allocation2 + $0x138] sm:$0xff]
    %v110 = vld [vmem:[#allocation2 + $0x140] sm:$0xff]
    %v111 = vld [vmem:[#allocation2 + $0x148] sm:$0xff]
    %v112 = vld [vmem:[#allocation2 + $0x150] sm:$0xff]
    %v113 = vld [vmem:[#allocation2 + $0x158] sm:$0xff]
    %v114 = vld [vmem:[#allocation2 + $0x160] sm:$0xff]
    %v115 = vld [vmem:[#allocation2 + $0x168] sm:$0xff]
    %v116 = vld [vmem:[#allocation2 + $0x170] sm:$0xff]
    %v117 = vld [vmem:[#allocation2 + $0x178] sm:$0xff]
    %v118 = vld [vmem:[#allocation2 + $0x180] sm:$0xff]
    %v119 = vld [vmem:[#allocation2 + $0x188] sm:$0xff]
    %v120 = vld [vmem:[#allocation2 + $0x190] sm:$0xff]
    %v121 = vld [vmem:[#allocation2 + $0x198] sm:$0xff]
    %v122 = vld [vmem:[#allocation2 + $0x1a0] sm:$0xff]
    %v123 = vld [vmem:[#allocation2 + $0x1a8] sm:$0xff]
    %v124 = vld [vmem:[#allocation2 + $0x1b0] sm:$0xff]
    %v125 = vld [vmem:[#allocation2 + $0x1b8] sm:$0xff]
    %v126 = vld [vmem:[#allocation2 + $0x1c0] sm:$0xff]
    %v127 = vld [vmem:[#allocation2 + $0x1c8] sm:$0xff]
    %v128 = vld [vmem:[#allocation2 + $0x1d0] sm:$0xff]
    %v129 = vld [vmem:[#allocation2 + $0x1d8] sm:$0xff]
    %v130 = vld [vmem:[#allocation2 + $0x1e0] sm:$0xff]
    %v131 = vld [vmem:[#allocation2 + $0x1e8] sm:$0xff]
    %v132 = vld [vmem:[#allocation2 + $0x1f0] sm:$0xff]
    %v133 = vld [vmem:[#allocation2 + $0x1f8] sm:$0xff]
    %v134 = vld [vmem:[%s2] sm:$0xf]
    %v199 = vunpack.c.l.b16 %v70
    %v200 = vunpack.c.h.b16 %v70
    %v201 = vunpack.c.l.b16 %v71
    %v202 = vunpack.c.h.b16 %v71
    %v203 = vunpack.c.l.b16 %v72
    %v204 = vunpack.c.h.b16 %v72
    %v205 = vunpack.c.l.b16 %v73
    %v206 = vunpack.c.h.b16 %v73
    %v207 = vunpack.c.l.b16 %v74
    %v208 = vunpack.c.h.b16 %v74
    %v209 = vunpack.c.l.b16 %v75
    %v210 = vunpack.c.h.b16 %v75
    %v211 = vunpack.c.l.b16 %v76
    %v212 = vunpack.c.h.b16 %v76
    %v213 = vunpack.c.l.b16 %v77
    %v214 = vunpack.c.h.b16 %v77
    %v215 = vunpack.c.l.b16 %v78
    %v216 = vunpack.c.h.b16 %v78
    %v217 = vunpack.c.l.b16 %v79
    %v218 = vunpack.c.h.b16 %v79
    %v219 = vunpack.c.l.b16 %v80
    %v220 = vunpack.c.h.b16 %v80
    %v221 = vunpack.c.l.b16 %v81
    %v222 = vunpack.c.h.b16 %v81
    %v223 = vunpack.c.l.b16 %v82
    %v224 = vunpack.c.h.b16 %v82
    %v225 = vunpack.c.l.b16 %v83
    %v226 = vunpack.c.h.b16 %v83
    %v227 = vunpack.c.l.b16 %v84
    %v228 = vunpack.c.h.b16 %v84
    %v229 = vunpack.c.l.b16 %v85
    %v230 = vunpack.c.h.b16 %v85
    %v231 = vunpack.c.l.b16 %v86
    %v232 = vunpack.c.h.b16 %v86
    %v233 = vunpack.c.l.b16 %v87
    %v234 = vunpack.c.h.b16 %v87
    %v235 = vunpack.c.l.b16 %v88
    %v236 = vunpack.c.h.b16 %v88
    %v237 = vunpack.c.l.b16 %v89
    %v238 = vunpack.c.h.b16 %v89
    %v239 = vunpack.c.l.b16 %v90
    %v240 = vunpack.c.h.b16 %v90
    %v241 = vunpack.c.l.b16 %v91
    %v242 = vunpack.c.h.b16 %v91
    %v243 = vunpack.c.l.b16 %v92
    %v244 = vunpack.c.h.b16 %v92
    %v245 = vunpack.c.l.b16 %v93
    %v246 = vunpack.c.h.b16 %v93
    %v247 = vunpack.c.l.b16 %v94
    %v248 = vunpack.c.h.b16 %v94
    %v249 = vunpack.c.l.b16 %v95
    %v250 = vunpack.c.h.b16 %v95
    %v251 = vunpack.c.l.b16 %v96
    %v252 = vunpack.c.h.b16 %v96
    %v253 = vunpack.c.l.b16 %v97
    %v254 = vunpack.c.h.b16 %v97
    %v255 = vunpack.c.l.b16 %v98
    %v256 = vunpack.c.h.b16 %v98
    %v257 = vunpack.c.l.b16 %v99
    %v258 = vunpack.c.h.b16 %v99
    %v259 = vunpack.c.l.b16 %v100
    %v260 = vunpack.c.h.b16 %v100
    %v261 = vunpack.c.l.b16 %v101
    %v262 = vunpack.c.h.b16 %v101
    %v263 = vunpack.c.l.b16 %v102
    %v264 = vunpack.c.h.b16 %v102
    %v265 = vunpack.c.l.b16 %v103
    %v266 = vunpack.c.h.b16 %v103
    %v267 = vunpack.c.l.b16 %v104
    %v268 = vunpack.c.h.b16 %v104
    %v269 = vunpack.c.l.b16 %v105
    %v270 = vunpack.c.h.b16 %v105
    %v271 = vunpack.c.l.b16 %v106
    %v272 = vunpack.c.h.b16 %v106
    %v273 = vunpack.c.l.b16 %v107
    %v274 = vunpack.c.h.b16 %v107
    %v275 = vunpack.c.l.b16 %v108
    %v276 = vunpack.c.h.b16 %v108
    %v277 = vunpack.c.l.b16 %v109
    %v278 = vunpack.c.h.b16 %v109
    %v279 = vunpack.c.l.b16 %v110
    %v280 = vunpack.c.h.b16 %v110
    %v281 = vunpack.c.l.b16 %v111
    %v282 = vunpack.c.h.b16 %v111
    %v283 = vunpack.c.l.b16 %v112
    %v284 = vunpack.c.h.b16 %v112
    %v285 = vunpack.c.l.b16 %v113
    %v286 = vunpack.c.h.b16 %v113
    %v287 = vunpack.c.l.b16 %v114
    %v288 = vunpack.c.h.b16 %v114
    %v289 = vunpack.c.l.b16 %v115
    %v290 = vunpack.c.h.b16 %v115
    %v291 = vunpack.c.l.b16 %v116
    %v292 = vunpack.c.h.b16 %v116
    %v293 = vunpack.c.l.b16 %v117
    %v294 = vunpack.c.h.b16 %v117
    %v295 = vunpack.c.l.b16 %v118
    %v296 = vunpack.c.h.b16 %v118
    %v297 = vunpack.c.l.b16 %v119
    %v298 = vunpack.c.h.b16 %v119
    %v299 = vunpack.c.l.b16 %v120
    %v300 = vunpack.c.h.b16 %v120
    %v301 = vunpack.c.l.b16 %v121
    %v302 = vunpack.c.h.b16 %v121
    %v303 = vunpack.c.l.b16 %v122
    %v304 = vunpack.c.h.b16 %v122
    %v305 = vunpack.c.l.b16 %v123
    %v306 = vunpack.c.h.b16 %v123
    %v307 = vunpack.c.l.b16 %v124
    %v308 = vunpack.c.h.b16 %v124
    %v309 = vunpack.c.l.b16 %v125
    %v310 = vunpack.c.h.b16 %v125
    %v311 = vunpack.c.l.b16 %v126
    %v312 = vunpack.c.h.b16 %v126
    %v313 = vunpack.c.l.b16 %v127
    %v314 = vunpack.c.h.b16 %v127
    %v315 = vunpack.c.l.b16 %v128
    %v316 = vunpack.c.h.b16 %v128
    %v317 = vunpack.c.l.b16 %v129
    %v318 = vunpack.c.h.b16 %v129
    %v319 = vunpack.c.l.b16 %v130
    %v320 = vunpack.c.h.b16 %v130
    %v321 = vunpack.c.l.b16 %v131
    %v322 = vunpack.c.h.b16 %v131
    %v323 = vunpack.c.l.b16 %v132
    %v324 = vunpack.c.h.b16 %v132
    %v325 = vunpack.c.l.b16 %v133
    %v326 = vunpack.c.h.b16 %v133
    %v327 = vpack.c.b16 %v203, %v199
    %v328 = vpack.c.b16 %v204, %v200
    %v329 = vpack.c.b16 %v205, %v201
    %v330 = vpack.c.b16 %v206, %v202
    %v331 = vpack.c.b16 %v211, %v207
    %v332 = vpack.c.b16 %v212, %v208
    %v333 = vpack.c.b16 %v213, %v209
    %v334 = vpack.c.b16 %v214, %v210
    %v335 = vpack.c.b16 %v219, %v215
    %v336 = vpack.c.b16 %v220, %v216
    %v337 = vpack.c.b16 %v221, %v217
    %v338 = vpack.c.b16 %v222, %v218
    %v339 = vpack.c.b16 %v227, %v223
    %v340 = vpack.c.b16 %v228, %v224
    %v341 = vpack.c.b16 %v229, %v225
    %v342 = vpack.c.b16 %v230, %v226
    %v343 = vpack.c.b16 %v235, %v231
    %v344 = vpack.c.b16 %v236, %v232
    %v345 = vpack.c.b16 %v237, %v233
    %v346 = vpack.c.b16 %v238, %v234
    %v347 = vpack.c.b16 %v243, %v239
    %v348 = vpack.c.b16 %v244, %v240
    %v349 = vpack.c.b16 %v245, %v241
    %v350 = vpack.c.b16 %v246, %v242
    %v351 = vpack.c.b16 %v251, %v247
    %v352 = vpack.c.b16 %v252, %v248
    %v353 = vpack.c.b16 %v253, %v249
    %v354 = vpack.c.b16 %v254, %v250
    %v355 = vpack.c.b16 %v259, %v255
    %v356 = vpack.c.b16 %v260, %v256
    %v357 = vpack.c.b16 %v261, %v257
    %v358 = vpack.c.b16 %v262, %v258
    %v359 = vpack.c.b16 %v267, %v263
    %v360 = vpack.c.b16 %v268, %v264
    %v361 = vpack.c.b16 %v269, %v265
    %v362 = vpack.c.b16 %v270, %v266
    %v363 = vpack.c.b16 %v275, %v271
    %v364 = vpack.c.b16 %v276, %v272
    %v365 = vpack.c.b16 %v277, %v273
    %v366 = vpack.c.b16 %v278, %v274
    %v367 = vpack.c.b16 %v283, %v279
    %v368 = vpack.c.b16 %v284, %v280
    %v369 = vpack.c.b16 %v285, %v281
    %v370 = vpack.c.b16 %v286, %v282
    %v371 = vpack.c.b16 %v291, %v287
    %v372 = vpack.c.b16 %v292, %v288
    %v373 = vpack.c.b16 %v293, %v289
    %v374 = vpack.c.b16 %v294, %v290
    %v375 = vpack.c.b16 %v299, %v295
    %v376 = vpack.c.b16 %v300, %v296
    %v377 = vpack.c.b16 %v301, %v297
    %v378 = vpack.c.b16 %v302, %v298
    %v379 = vpack.c.b16 %v307, %v303
    %v380 = vpack.c.b16 %v308, %v304
    %v381 = vpack.c.b16 %v309, %v305
    %v382 = vpack.c.b16 %v310, %v306
    %v383 = vpack.c.b16 %v315, %v311
    %v384 = vpack.c.b16 %v316, %v312
    %v385 = vpack.c.b16 %v317, %v313
    %v386 = vpack.c.b16 %v318, %v314
    %v387 = vpack.c.b16 %v323, %v319
    %v388 = vpack.c.b16 %v324, %v320
    %v389 = vpack.c.b16 %v325, %v321
    %v390 = vpack.c.b16 %v326, %v322
    %v456 = vlaneseq
    %v457 = vshrl.u32 %v456, 7
    %v458 = vsub.s32 0, %v457
    %v459 = vrot.slane %v134, %v458
    %v460 = vlaneseq
    %v461 = vshrl.u32 %v460, 7
    %v462 = vsub.s32 1, %v461
    %v463 = vrot.slane %v134, %v462
    %v464 = vlaneseq
    %v465 = vshrl.u32 %v464, 7
    %v466 = vsub.s32 2, %v465
    %v467 = vrot.slane %v134, %v466
    %v468 = vlaneseq
    %v469 = vshrl.u32 %v468, 7
    %v470 = vsub.s32 3, %v469
    %v471 = vrot.slane %v134, %v470
    %476 = vmatprep.subr.bf16.mxu0 %v328
    %477 = vmatpush1.bf16.msra.mxu0 %v327
    %478 = vmatprep.subr.bf16.mxu0 %v332
    %479 = vmatpush1.bf16.msra.mxu0 %v331
    %480 = vmatprep.subr.bf16.mxu0 %v336
    %481 = vmatpush1.bf16.msra.mxu0 %v335
    %482 = vmatprep.subr.bf16.mxu0 %v340
    %483 = vmatpush1.bf16.msra.mxu0 %v339
    %484 = vmatprep.subr.bf16.mxu0 %v344
    %485 = vmatpush1.bf16.msra.mxu0 %v343
    %486 = vmatprep.subr.bf16.mxu0 %v348
    %487 = vmatpush1.bf16.msra.mxu0 %v347
    %488 = vmatprep.subr.bf16.mxu0 %v352
    %489 = vmatpush1.bf16.msra.mxu0 %v351
    %490 = vmatprep.subr.bf16.mxu0 %v356
    %491 = vmatpush1.bf16.msra.mxu0 %v355
    %492 = vmatprep.subr.bf16.mxu0 %v360
    %493 = vmatpush1.bf16.msra.mxu0 %v359
    %494 = vmatprep.subr.bf16.mxu0 %v364
    %495 = vmatpush1.bf16.msra.mxu0 %v363
    %496 = vmatprep.subr.bf16.mxu0 %v368
    %497 = vmatpush1.bf16.msra.mxu0 %v367
    %498 = vmatprep.subr.bf16.mxu0 %v372
    %499 = vmatpush1.bf16.msra.mxu0 %v371
    %500 = vmatprep.subr.bf16.mxu0 %v376
    %501 = vmatpush1.bf16.msra.mxu0 %v375
    %502 = vmatprep.subr.bf16.mxu0 %v380
    %503 = vmatpush1.bf16.msra.mxu0 %v379
    %504 = vmatprep.subr.bf16.mxu0 %v384
    %505 = vmatpush1.bf16.msra.mxu0 %v383
    %506 = vmatprep.subr.bf16.mxu0 %v388
    %507 = vmatpush1.bf16.msra.mxu0 %v387
    %508 = vmatprep.mubr.bf16.mxu0 %v69
    %509 = vmatmul.mubr.bf16.gmra.mrb[0].mxu0 %v68
    %v510 = vpop.f32.mrb[0].mxu0
    %v511 = vadd.f32 %v459, %v510
    %v512 = vpop.f32.mrb[0].mxu0
    %v513 = vadd.f32 %v463, %v512
    %v514 = vpop.f32.mrb[0].mxu0
    %v515 = vpop.f32.mrb[0].mxu0
    %516 = vdwg.mxu0
    %517 = vmatprep.subr.bf16.mxu0 %v330
    %518 = vmatpush1.bf16.msra.mxu0 %v329
    %519 = vmatprep.subr.bf16.mxu0 %v334
    %520 = vmatpush1.bf16.msra.mxu0 %v333
    %521 = vmatprep.subr.bf16.mxu0 %v338
    %522 = vmatpush1.bf16.msra.mxu0 %v337
    %523 = vmatprep.subr.bf16.mxu0 %v342
    %524 = vmatpush1.bf16.msra.mxu0 %v341
    %525 = vmatprep.subr.bf16.mxu0 %v346
    %526 = vmatpush1.bf16.msra.mxu0 %v345
    %527 = vmatprep.subr.bf16.mxu0 %v350
    %528 = vmatpush1.bf16.msra.mxu0 %v349
    %529 = vmatprep.subr.bf16.mxu0 %v354
    %530 = vmatpush1.bf16.msra.mxu0 %v353
    %531 = vmatprep.subr.bf16.mxu0 %v358
    %532 = vmatpush1.bf16.msra.mxu0 %v357
    %533 = vmatprep.subr.bf16.mxu0 %v362
    %534 = vmatpush1.bf16.msra.mxu0 %v361
    %535 = vmatprep.subr.bf16.mxu0 %v366
    %536 = vmatpush1.bf16.msra.mxu0 %v365
    %537 = vmatprep.subr.bf16.mxu0 %v370
    %538 = vmatpush1.bf16.msra.mxu0 %v369
    %539 = vmatprep.subr.bf16.mxu0 %v374
    %540 = vmatpush1.bf16.msra.mxu0 %v373
    %541 = vmatprep.subr.bf16.mxu0 %v378
    %542 = vmatpush1.bf16.msra.mxu0 %v377
    %543 = vmatprep.subr.bf16.mxu0 %v382
    %544 = vmatpush1.bf16.msra.mxu0 %v381
    %545 = vmatprep.subr.bf16.mxu0 %v386
    %546 = vmatpush1.bf16.msra.mxu0 %v385
    %547 = vmatprep.subr.bf16.mxu0 %v390
    %548 = vmatpush1.bf16.msra.mxu0 %v389
    %549 = vmatprep.mubr.bf16.mxu0 %v69
    %550 = vmatmul.mubr.bf16.gmra.mrb[0].mxu0 %v68
    %v551 = vpop.f32.mrb[0].mxu0
    %v552 = vadd.f32 %v467, %v551
    %v553 = vpop.f32.mrb[0].mxu0
    %v554 = vadd.f32 %v471, %v553
    %v555 = vpop.f32.mrb[0].mxu0
    %v556 = vpop.f32.mrb[0].mxu0
    %557 = vdwg.mxu0
    %v558 = vmax.f32 %v511, 0.0
    %v559 = vmax.f32 %v513, 0.0
    %v560 = vmax.f32 %v552, 0.0
    %v561 = vmax.f32 %v554, 0.0
    %v562 = vpack.c.bf16 %v558, %v558
    %v563 = vpack.c.bf16 %v559, %v559
    %v564 = vpack.c.bf16 %v560, %v560
    %v565 = vpack.c.bf16 %v561, %v561
    %v566 = vld [vmem:[#allocation5] sm:$0xff]
    %v567 = vld [vmem:[#allocation5 + $0x8] sm:$0xff]
    %v568 = vld [vmem:[#allocation5 + $0x10] sm:$0xff]
    %v569 = vld [vmem:[#allocation5 + $0x18] sm:$0xff]
    %v570 = vld [vmem:[#allocation5 + $0x20] sm:$0xff]
    %v571 = vld [vmem:[#allocation5 + $0x28] sm:$0xff]
    %v572 = vld [vmem:[#allocation5 + $0x30] sm:$0xff]
    %v573 = vld [vmem:[#allocation5 + $0x38] sm:$0xff]
    %v574 = vld [vmem:[#allocation5 + $0x40] sm:$0xff]
    %v575 = vld [vmem:[#allocation5 + $0x48] sm:$0xff]
    %v576 = vld [vmem:[#allocation5 + $0x50] sm:$0xff]
    %v577 = vld [vmem:[#allocation5 + $0x58] sm:$0xff]
    %v578 = vld [vmem:[#allocation5 + $0x60] sm:$0xff]
    %v579 = vld [vmem:[#allocation5 + $0x68] sm:$0xff]
    %v580 = vld [vmem:[#allocation5 + $0x70] sm:$0xff]
    %v581 = vld [vmem:[#allocation5 + $0x78] sm:$0xff]
    %v582 = vld [vmem:[#allocation5 + $0x80] sm:$0xff]
    %v583 = vld [vmem:[#allocation5 + $0x88] sm:$0xff]
    %v584 = vld [vmem:[#allocation5 + $0x90] sm:$0xff]
    %v585 = vld [vmem:[#allocation5 + $0x98] sm:$0xff]
    %v586 = vld [vmem:[#allocation5 + $0xa0] sm:$0xff]
    %v587 = vld [vmem:[#allocation5 + $0xa8] sm:$0xff]
    %v588 = vld [vmem:[#allocation5 + $0xb0] sm:$0xff]
    %v589 = vld [vmem:[#allocation5 + $0xb8] sm:$0xff]
    %v590 = vld [vmem:[#allocation5 + $0xc0] sm:$0xff]
    %v591 = vld [vmem:[#allocation5 + $0xc8] sm:$0xff]
    %v592 = vld [vmem:[#allocation5 + $0xd0] sm:$0xff]
    %v593 = vld [vmem:[#allocation5 + $0xd8] sm:$0xff]
    %v594 = vld [vmem:[#allocation5 + $0xe0] sm:$0xff]
    %v595 = vld [vmem:[#allocation5 + $0xe8] sm:$0xff]
    %v596 = vld [vmem:[#allocation5 + $0xf0] sm:$0xff]
    %v597 = vld [vmem:[#allocation5 + $0xf8] sm:$0xff]
    %v598 = vld [vmem:[#allocation5 + $0x100] sm:$0xff]
    %v599 = vld [vmem:[#allocation5 + $0x108] sm:$0xff]
    %v600 = vld [vmem:[#allocation5 + $0x110] sm:$0xff]
    %v601 = vld [vmem:[#allocation5 + $0x118] sm:$0xff]
    %v602 = vld [vmem:[#allocation5 + $0x120] sm:$0xff]
    %v603 = vld [vmem:[#allocation5 + $0x128] sm:$0xff]
    %v604 = vld [vmem:[#allocation5 + $0x130] sm:$0xff]
    %v605 = vld [vmem:[#allocation5 + $0x138] sm:$0xff]
    %v606 = vld [vmem:[#allocation5 + $0x140] sm:$0xff]
    %v607 = vld [vmem:[#allocation5 + $0x148] sm:$0xff]
    %v608 = vld [vmem:[#allocation5 + $0x150] sm:$0xff]
    %v609 = vld [vmem:[#allocation5 + $0x158] sm:$0xff]
    %v610 = vld [vmem:[#allocation5 + $0x160] sm:$0xff]
    %v611 = vld [vmem:[#allocation5 + $0x168] sm:$0xff]
    %v612 = vld [vmem:[#allocation5 + $0x170] sm:$0xff]
    %v613 = vld [vmem:[#allocation5 + $0x178] sm:$0xff]
    %v614 = vld [vmem:[#allocation5 + $0x180] sm:$0xff]
    %v615 = vld [vmem:[#allocation5 + $0x188] sm:$0xff]
    %v616 = vld [vmem:[#allocation5 + $0x190] sm:$0xff]
    %v617 = vld [vmem:[#allocation5 + $0x198] sm:$0xff]
    %v618 = vld [vmem:[#allocation5 + $0x1a0] sm:$0xff]
    %v619 = vld [vmem:[#allocation5 + $0x1a8] sm:$0xff]
    %v620 = vld [vmem:[#allocation5 + $0x1b0] sm:$0xff]
    %v621 = vld [vmem:[#allocation5 + $0x1b8] sm:$0xff]
    %v622 = vld [vmem:[#allocation5 + $0x1c0] sm:$0xff]
    %v623 = vld [vmem:[#allocation5 + $0x1c8] sm:$0xff]
    %v624 = vld [vmem:[#allocation5 + $0x1d0] sm:$0xff]
    %v625 = vld [vmem:[#allocation5 + $0x1d8] sm:$0xff]
    %v626 = vld [vmem:[#allocation5 + $0x1e0] sm:$0xff]
    %v627 = vld [vmem:[#allocation5 + $0x1e8] sm:$0xff]
    %v628 = vld [vmem:[#allocation5 + $0x1f0] sm:$0xff]
    %v629 = vld [vmem:[#allocation5 + $0x1f8] sm:$0xff]
    %v630 = vld [vmem:[#allocation5 + $0x200] sm:$0xff]
    %v631 = vld [vmem:[#allocation5 + $0x208] sm:$0xff]
    %v632 = vld [vmem:[#allocation5 + $0x210] sm:$0xff]
    %v633 = vld [vmem:[#allocation5 + $0x218] sm:$0xff]
    %v634 = vld [vmem:[#allocation5 + $0x220] sm:$0xff]
    %v635 = vld [vmem:[#allocation5 + $0x228] sm:$0xff]
    %v636 = vld [vmem:[#allocation5 + $0x230] sm:$0xff]
    %v637 = vld [vmem:[#allocation5 + $0x238] sm:$0xff]
    %v638 = vld [vmem:[#allocation5 + $0x240] sm:$0xff]
    %v639 = vld [vmem:[#allocation5 + $0x248] sm:$0xff]
    %v640 = vld [vmem:[#allocation5 + $0x250] sm:$0xff]
    %v641 = vld [vmem:[#allocation5 + $0x258] sm:$0xff]
    %v642 = vld [vmem:[#allocation5 + $0x260] sm:$0xff]
    %v643 = vld [vmem:[#allocation5 + $0x268] sm:$0xff]
    %v644 = vld [vmem:[#allocation5 + $0x270] sm:$0xff]
    %v645 = vld [vmem:[#allocation5 + $0x278] sm:$0xff]
    %v646 = vld [vmem:[#allocation5 + $0x280] sm:$0xff]
    %v647 = vld [vmem:[#allocation5 + $0x288] sm:$0xff]
    %v648 = vld [vmem:[#allocation5 + $0x290] sm:$0xff]
    %v649 = vld [vmem:[#allocation5 + $0x298] sm:$0xff]
    %v650 = vld [vmem:[#allocation5 + $0x2a0] sm:$0xff]
    %v651 = vld [vmem:[#allocation5 + $0x2a8] sm:$0xff]
    %v652 = vld [vmem:[#allocation5 + $0x2b0] sm:$0xff]
    %v653 = vld [vmem:[#allocation5 + $0x2b8] sm:$0xff]
    %v654 = vld [vmem:[#allocation5 + $0x2c0] sm:$0xff]
    %v655 = vld [vmem:[#allocation5 + $0x2c8] sm:$0xff]
    %v656 = vld [vmem:[#allocation5 + $0x2d0] sm:$0xff]
    %v657 = vld [vmem:[#allocation5 + $0x2d8] sm:$0xff]
    %v658 = vld [vmem:[#allocation5 + $0x2e0] sm:$0xff]
    %v659 = vld [vmem:[#allocation5 + $0x2e8] sm:$0xff]
    %v660 = vld [vmem:[#allocation5 + $0x2f0] sm:$0xff]
    %v661 = vld [vmem:[#allocation5 + $0x2f8] sm:$0xff]
    %v662 = vld [vmem:[#allocation5 + $0x300] sm:$0xff]
    %v663 = vld [vmem:[#allocation5 + $0x308] sm:$0xff]
    %v664 = vld [vmem:[#allocation5 + $0x310] sm:$0xff]
    %v665 = vld [vmem:[#allocation5 + $0x318] sm:$0xff]
    %v666 = vld [vmem:[#allocation5 + $0x320] sm:$0xff]
    %v667 = vld [vmem:[#allocation5 + $0x328] sm:$0xff]
    %v668 = vld [vmem:[#allocation5 + $0x330] sm:$0xff]
    %v669 = vld [vmem:[#allocation5 + $0x338] sm:$0xff]
    %v670 = vld [vmem:[#allocation5 + $0x340] sm:$0xff]
    %v671 = vld [vmem:[#allocation5 + $0x348] sm:$0xff]
    %v672 = vld [vmem:[#allocation5 + $0x350] sm:$0xff]
    %v673 = vld [vmem:[#allocation5 + $0x358] sm:$0xff]
    %v674 = vld [vmem:[#allocation5 + $0x360] sm:$0xff]
    %v675 = vld [vmem:[#allocation5 + $0x368] sm:$0xff]
    %v676 = vld [vmem:[#allocation5 + $0x370] sm:$0xff]
    %v677 = vld [vmem:[#allocation5 + $0x378] sm:$0xff]
    %v678 = vld [vmem:[#allocation5 + $0x380] sm:$0xff]
    %v679 = vld [vmem:[#allocation5 + $0x388] sm:$0xff]
    %v680 = vld [vmem:[#allocation5 + $0x390] sm:$0xff]
    %v681 = vld [vmem:[#allocation5 + $0x398] sm:$0xff]
    %v682 = vld [vmem:[#allocation5 + $0x3a0] sm:$0xff]
    %v683 = vld [vmem:[#allocation5 + $0x3a8] sm:$0xff]
    %v684 = vld [vmem:[#allocation5 + $0x3b0] sm:$0xff]
    %v685 = vld [vmem:[#allocation5 + $0x3b8] sm:$0xff]
    %v686 = vld [vmem:[#allocation5 + $0x3c0] sm:$0xff]
    %v687 = vld [vmem:[#allocation5 + $0x3c8] sm:$0xff]
    %v688 = vld [vmem:[#allocation5 + $0x3d0] sm:$0xff]
    %v689 = vld [vmem:[#allocation5 + $0x3d8] sm:$0xff]
    %v690 = vld [vmem:[#allocation5 + $0x3e0] sm:$0xff]
    %v691 = vld [vmem:[#allocation5 + $0x3e8] sm:$0xff]
    %v692 = vld [vmem:[#allocation5 + $0x3f0] sm:$0xff]
    %v693 = vld [vmem:[#allocation5 + $0x3f8] sm:$0xff]
    %v694 = vld [vmem:[%s4] sm:$0xf]
    %v823 = vunpack.c.l.b16 %v566
    %v824 = vunpack.c.h.b16 %v566
    %v825 = vunpack.c.l.b16 %v567
    %v826 = vunpack.c.h.b16 %v567
    %v827 = vunpack.c.l.b16 %v568
    %v828 = vunpack.c.h.b16 %v568
    %v829 = vunpack.c.l.b16 %v569
    %v830 = vunpack.c.h.b16 %v569
    %v831 = vunpack.c.l.b16 %v570
    %v832 = vunpack.c.h.b16 %v570
    %v833 = vunpack.c.l.b16 %v571
    %v834 = vunpack.c.h.b16 %v571
    %v835 = vunpack.c.l.b16 %v572
    %v836 = vunpack.c.h.b16 %v572
    %v837 = vunpack.c.l.b16 %v573
    %v838 = vunpack.c.h.b16 %v573
    %v839 = vunpack.c.l.b16 %v574
    %v840 = vunpack.c.h.b16 %v574
    %v841 = vunpack.c.l.b16 %v575
    %v842 = vunpack.c.h.b16 %v575
    %v843 = vunpack.c.l.b16 %v576
    %v844 = vunpack.c.h.b16 %v576
    %v845 = vunpack.c.l.b16 %v577
    %v846 = vunpack.c.h.b16 %v577
    %v847 = vunpack.c.l.b16 %v578
    %v848 = vunpack.c.h.b16 %v578
    %v849 = vunpack.c.l.b16 %v579
    %v850 = vunpack.c.h.b16 %v579
    %v851 = vunpack.c.l.b16 %v580
    %v852 = vunpack.c.h.b16 %v580
    %v853 = vunpack.c.l.b16 %v581
    %v854 = vunpack.c.h.b16 %v581
    %v855 = vunpack.c.l.b16 %v582
    %v856 = vunpack.c.h.b16 %v582
    %v857 = vunpack.c.l.b16 %v583
    %v858 = vunpack.c.h.b16 %v583
    %v859 = vunpack.c.l.b16 %v584
    %v860 = vunpack.c.h.b16 %v584
    %v861 = vunpack.c.l.b16 %v585
    %v862 = vunpack.c.h.b16 %v585
    %v863 = vunpack.c.l.b16 %v586
    %v864 = vunpack.c.h.b16 %v586
    %v865 = vunpack.c.l.b16 %v587
    %v866 = vunpack.c.h.b16 %v587
    %v867 = vunpack.c.l.b16 %v588
    %v868 = vunpack.c.h.b16 %v588
    %v869 = vunpack.c.l.b16 %v589
    %v870 = vunpack.c.h.b16 %v589
    %v871 = vunpack.c.l.b16 %v590
    %v872 = vunpack.c.h.b16 %v590
    %v873 = vunpack.c.l.b16 %v591
    %v874 = vunpack.c.h.b16 %v591
    %v875 = vunpack.c.l.b16 %v592
    %v876 = vunpack.c.h.b16 %v592
    %v877 = vunpack.c.l.b16 %v593
    %v878 = vunpack.c.h.b16 %v593
    %v879 = vunpack.c.l.b16 %v594
    %v880 = vunpack.c.h.b16 %v594
    %v881 = vunpack.c.l.b16 %v595
    %v882 = vunpack.c.h.b16 %v595
    %v883 = vunpack.c.l.b16 %v596
    %v884 = vunpack.c.h.b16 %v596
    %v885 = vunpack.c.l.b16 %v597
    %v886 = vunpack.c.h.b16 %v597
    %v887 = vunpack.c.l.b16 %v598
    %v888 = vunpack.c.h.b16 %v598
    %v889 = vunpack.c.l.b16 %v599
    %v890 = vunpack.c.h.b16 %v599
    %v891 = vunpack.c.l.b16 %v600
    %v892 = vunpack.c.h.b16 %v600
    %v893 = vunpack.c.l.b16 %v601
    %v894 = vunpack.c.h.b16 %v601
    %v895 = vunpack.c.l.b16 %v602
    %v896 = vunpack.c.h.b16 %v602
    %v897 = vunpack.c.l.b16 %v603
    %v898 = vunpack.c.h.b16 %v603
    %v899 = vunpack.c.l.b16 %v604
    %v900 = vunpack.c.h.b16 %v604
    %v901 = vunpack.c.l.b16 %v605
    %v902 = vunpack.c.h.b16 %v605
    %v903 = vunpack.c.l.b16 %v606
    %v904 = vunpack.c.h.b16 %v606
    %v905 = vunpack.c.l.b16 %v607
    %v906 = vunpack.c.h.b16 %v607
    %v907 = vunpack.c.l.b16 %v608
    %v908 = vunpack.c.h.b16 %v608
    %v909 = vunpack.c.l.b16 %v609
    %v910 = vunpack.c.h.b16 %v609
    %v911 = vunpack.c.l.b16 %v610
    %v912 = vunpack.c.h.b16 %v610
    %v913 = vunpack.c.l.b16 %v611
    %v914 = vunpack.c.h.b16 %v611
    %v915 = vunpack.c.l.b16 %v612
    %v916 = vunpack.c.h.b16 %v612
    %v917 = vunpack.c.l.b16 %v613
    %v918 = vunpack.c.h.b16 %v613
    %v919 = vunpack.c.l.b16 %v614
    %v920 = vunpack.c.h.b16 %v614
    %v921 = vunpack.c.l.b16 %v615
    %v922 = vunpack.c.h.b16 %v615
    %v923 = vunpack.c.l.b16 %v616
    %v924 = vunpack.c.h.b16 %v616
    %v925 = vunpack.c.l.b16 %v617
    %v926 = vunpack.c.h.b16 %v617
    %v927 = vunpack.c.l.b16 %v618
    %v928 = vunpack.c.h.b16 %v618
    %v929 = vunpack.c.l.b16 %v619
    %v930 = vunpack.c.h.b16 %v619
    %v931 = vunpack.c.l.b16 %v620
    %v932 = vunpack.c.h.b16 %v620
    %v933 = vunpack.c.l.b16 %v621
    %v934 = vunpack.c.h.b16 %v621
    %v935 = vunpack.c.l.b16 %v622
    %v936 = vunpack.c.h.b16 %v622
    %v937 = vunpack.c.l.b16 %v623
    %v938 = vunpack.c.h.b16 %v623
    %v939 = vunpack.c.l.b16 %v624
    %v940 = vunpack.c.h.b16 %v624
    %v941 = vunpack.c.l.b16 %v625
    %v942 = vunpack.c.h.b16 %v625
    %v943 = vunpack.c.l.b16 %v626
    %v944 = vunpack.c.h.b16 %v626
    %v945 = vunpack.c.l.b16 %v627
    %v946 = vunpack.c.h.b16 %v627
    %v947 = vunpack.c.l.b16 %v628
    %v948 = vunpack.c.h.b16 %v628
    %v949 = vunpack.c.l.b16 %v629
    %v950 = vunpack.c.h.b16 %v629
    %v951 = vunpack.c.l.b16 %v630
    %v952 = vunpack.c.h.b16 %v630
    %v953 = vunpack.c.l.b16 %v631
    %v954 = vunpack.c.h.b16 %v631
    %v955 = vunpack.c.l.b16 %v632
    %v956 = vunpack.c.h.b16 %v632
    %v957 = vunpack.c.l.b16 %v633
    %v958 = vunpack.c.h.b16 %v633
    %v959 = vunpack.c.l.b16 %v634
    %v960 = vunpack.c.h.b16 %v634
    %v961 = vunpack.c.l.b16 %v635
    %v962 = vunpack.c.h.b16 %v635
    %v963 = vunpack.c.l.b16 %v636
    %v964 = vunpack.c.h.b16 %v636
    %v965 = vunpack.c.l.b16 %v637
    %v966 = vunpack.c.h.b16 %v637
    %v967 = vunpack.c.l.b16 %v638
    %v968 = vunpack.c.h.b16 %v638
    %v969 = vunpack.c.l.b16 %v639
    %v970 = vunpack.c.h.b16 %v639
    %v971 = vunpack.c.l.b16 %v640
    %v972 = vunpack.c.h.b16 %v640
    %v973 = vunpack.c.l.b16 %v641
    %v974 = vunpack.c.h.b16 %v641
    %v975 = vunpack.c.l.b16 %v642
    %v976 = vunpack.c.h.b16 %v642
    %v977 = vunpack.c.l.b16 %v643
    %v978 = vunpack.c.h.b16 %v643
    %v979 = vunpack.c.l.b16 %v644
    %v980 = vunpack.c.h.b16 %v644
    %v981 = vunpack.c.l.b16 %v645
    %v982 = vunpack.c.h.b16 %v645
    %v983 = vunpack.c.l.b16 %v646
    %v984 = vunpack.c.h.b16 %v646
    %v985 = vunpack.c.l.b16 %v647
    %v986 = vunpack.c.h.b16 %v647
    %v987 = vunpack.c.l.b16 %v648
    %v988 = vunpack.c.h.b16 %v648
    %v989 = vunpack.c.l.b16 %v649
    %v990 = vunpack.c.h.b16 %v649
    %v991 = vunpack.c.l.b16 %v650
    %v992 = vunpack.c.h.b16 %v650
    %v993 = vunpack.c.l.b16 %v651
    %v994 = vunpack.c.h.b16 %v651
    %v995 = vunpack.c.l.b16 %v652
    %v996 = vunpack.c.h.b16 %v652
    %v997 = vunpack.c.l.b16 %v653
    %v998 = vunpack.c.h.b16 %v653
    %v999 = vunpack.c.l.b16 %v654
    %v1000 = vunpack.c.h.b16 %v654
    %v1001 = vunpack.c.l.b16 %v655
    %v1002 = vunpack.c.h.b16 %v655
    %v1003 = vunpack.c.l.b16 %v656
    %v1004 = vunpack.c.h.b16 %v656
    %v1005 = vunpack.c.l.b16 %v657
    %v1006 = vunpack.c.h.b16 %v657
    %v1007 = vunpack.c.l.b16 %v658
    %v1008 = vunpack.c.h.b16 %v658
    %v1009 = vunpack.c.l.b16 %v659
    %v1010 = vunpack.c.h.b16 %v659
    %v1011 = vunpack.c.l.b16 %v660
    %v1012 = vunpack.c.h.b16 %v660
    %v1013 = vunpack.c.l.b16 %v661
    %v1014 = vunpack.c.h.b16 %v661
    %v1015 = vunpack.c.l.b16 %v662
    %v1016 = vunpack.c.h.b16 %v662
    %v1017 = vunpack.c.l.b16 %v663
    %v1018 = vunpack.c.h.b16 %v663
    %v1019 = vunpack.c.l.b16 %v664
    %v1020 = vunpack.c.h.b16 %v664
    %v1021 = vunpack.c.l.b16 %v665
    %v1022 = vunpack.c.h.b16 %v665
    %v1023 = vunpack.c.l.b16 %v666
    %v1024 = vunpack.c.h.b16 %v666
    %v1025 = vunpack.c.l.b16 %v667
    %v1026 = vunpack.c.h.b16 %v667
    %v1027 = vunpack.c.l.b16 %v668
    %v1028 = vunpack.c.h.b16 %v668
    %v1029 = vunpack.c.l.b16 %v669
    %v1030 = vunpack.c.h.b16 %v669
    %v1031 = vunpack.c.l.b16 %v670
    %v1032 = vunpack.c.h.b16 %v670
    %v1033 = vunpack.c.l.b16 %v671
    %v1034 = vunpack.c.h.b16 %v671
    %v1035 = vunpack.c.l.b16 %v672
    %v1036 = vunpack.c.h.b16 %v672
    %v1037 = vunpack.c.l.b16 %v673
    %v1038 = vunpack.c.h.b16 %v673
    %v1039 = vunpack.c.l.b16 %v674
    %v1040 = vunpack.c.h.b16 %v674
    %v1041 = vunpack.c.l.b16 %v675
    %v1042 = vunpack.c.h.b16 %v675
    %v1043 = vunpack.c.l.b16 %v676
    %v1044 = vunpack.c.h.b16 %v676
    %v1045 = vunpack.c.l.b16 %v677
    %v1046 = vunpack.c.h.b16 %v677
    %v1047 = vunpack.c.l.b16 %v678
    %v1048 = vunpack.c.h.b16 %v678
    %v1049 = vunpack.c.l.b16 %v679
    %v1050 = vunpack.c.h.b16 %v679
    %v1051 = vunpack.c.l.b16 %v680
    %v1052 = vunpack.c.h.b16 %v680
    %v1053 = vunpack.c.l.b16 %v681
    %v1054 = vunpack.c.h.b16 %v681
    %v1055 = vunpack.c.l.b16 %v682
    %v1056 = vunpack.c.h.b16 %v682
    %v1057 = vunpack.c.l.b16 %v683
    %v1058 = vunpack.c.h.b16 %v683
    %v1059 = vunpack.c.l.b16 %v684
    %v1060 = vunpack.c.h.b16 %v684
    %v1061 = vunpack.c.l.b16 %v685
    %v1062 = vunpack.c.h.b16 %v685
    %v1063 = vunpack.c.l.b16 %v686
    %v1064 = vunpack.c.h.b16 %v686
    %v1065 = vunpack.c.l.b16 %v687
    %v1066 = vunpack.c.h.b16 %v687
    %v1067 = vunpack.c.l.b16 %v688
    %v1068 = vunpack.c.h.b16 %v688
    %v1069 = vunpack.c.l.b16 %v689
    %v1070 = vunpack.c.h.b16 %v689
    %v1071 = vunpack.c.l.b16 %v690
    %v1072 = vunpack.c.h.b16 %v690
    %v1073 = vunpack.c.l.b16 %v691
    %v1074 = vunpack.c.h.b16 %v691
    %v1075 = vunpack.c.l.b16 %v692
    %v1076 = vunpack.c.h.b16 %v692
    %v1077 = vunpack.c.l.b16 %v693
    %v1078 = vunpack.c.h.b16 %v693
    %v1079 = vpack.c.b16 %v827, %v823
    %v1080 = vpack.c.b16 %v828, %v824
    %v1081 = vpack.c.b16 %v829, %v825
    %v1082 = vpack.c.b16 %v830, %v826
    %v1083 = vpack.c.b16 %v835, %v831
    %v1084 = vpack.c.b16 %v836, %v832
    %v1085 = vpack.c.b16 %v837, %v833
    %v1086 = vpack.c.b16 %v838, %v834
    %v1087 = vpack.c.b16 %v843, %v839
    %v1088 = vpack.c.b16 %v844, %v840
    %v1089 = vpack.c.b16 %v845, %v841
    %v1090 = vpack.c.b16 %v846, %v842
    %v1091 = vpack.c.b16 %v851, %v847
    %v1092 = vpack.c.b16 %v852, %v848
    %v1093 = vpack.c.b16 %v853, %v849
    %v1094 = vpack.c.b16 %v854, %v850
    %v1095 = vpack.c.b16 %v859, %v855
    %v1096 = vpack.c.b16 %v860, %v856
    %v1097 = vpack.c.b16 %v861, %v857
    %v1098 = vpack.c.b16 %v862, %v858
    %v1099 = vpack.c.b16 %v867, %v863
    %v1100 = vpack.c.b16 %v868, %v864
    %v1101 = vpack.c.b16 %v869, %v865
    %v1102 = vpack.c.b16 %v870, %v866
    %v1103 = vpack.c.b16 %v875, %v871
    %v1104 = vpack.c.b16 %v876, %v872
    %v1105 = vpack.c.b16 %v877, %v873
    %v1106 = vpack.c.b16 %v878, %v874
    %v1107 = vpack.c.b16 %v883, %v879
    %v1108 = vpack.c.b16 %v884, %v880
    %v1109 = vpack.c.b16 %v885, %v881
    %v1110 = vpack.c.b16 %v886, %v882
    %v1111 = vpack.c.b16 %v891, %v887
    %v1112 = vpack.c.b16 %v892, %v888
    %v1113 = vpack.c.b16 %v893, %v889
    %v1114 = vpack.c.b16 %v894, %v890
    %v1115 = vpack.c.b16 %v899, %v895
    %v1116 = vpack.c.b16 %v900, %v896
    %v1117 = vpack.c.b16 %v901, %v897
    %v1118 = vpack.c.b16 %v902, %v898
    %v1119 = vpack.c.b16 %v907, %v903
    %v1120 = vpack.c.b16 %v908, %v904
    %v1121 = vpack.c.b16 %v909, %v905
    %v1122 = vpack.c.b16 %v910, %v906
    %v1123 = vpack.c.b16 %v915, %v911
    %v1124 = vpack.c.b16 %v916, %v912
    %v1125 = vpack.c.b16 %v917, %v913
    %v1126 = vpack.c.b16 %v918, %v914
    %v1127 = vpack.c.b16 %v923, %v919
    %v1128 = vpack.c.b16 %v924, %v920
    %v1129 = vpack.c.b16 %v925, %v921
    %v1130 = vpack.c.b16 %v926, %v922
    %v1131 = vpack.c.b16 %v931, %v927
    %v1132 = vpack.c.b16 %v932, %v928
    %v1133 = vpack.c.b16 %v933, %v929
    %v1134 = vpack.c.b16 %v934, %v930
    %v1135 = vpack.c.b16 %v939, %v935
    %v1136 = vpack.c.b16 %v940, %v936
    %v1137 = vpack.c.b16 %v941, %v937
    %v1138 = vpack.c.b16 %v942, %v938
    %v1139 = vpack.c.b16 %v947, %v943
    %v1140 = vpack.c.b16 %v948, %v944
    %v1141 = vpack.c.b16 %v949, %v945
    %v1142 = vpack.c.b16 %v950, %v946
    %v1143 = vpack.c.b16 %v955, %v951
    %v1144 = vpack.c.b16 %v956, %v952
    %v1145 = vpack.c.b16 %v957, %v953
    %v1146 = vpack.c.b16 %v958, %v954
    %v1147 = vpack.c.b16 %v963, %v959
    %v1148 = vpack.c.b16 %v964, %v960
    %v1149 = vpack.c.b16 %v965, %v961
    %v1150 = vpack.c.b16 %v966, %v962
    %v1151 = vpack.c.b16 %v971, %v967
    %v1152 = vpack.c.b16 %v972, %v968
    %v1153 = vpack.c.b16 %v973, %v969
    %v1154 = vpack.c.b16 %v974, %v970
    %v1155 = vpack.c.b16 %v979, %v975
    %v1156 = vpack.c.b16 %v980, %v976
    %v1157 = vpack.c.b16 %v981, %v977
    %v1158 = vpack.c.b16 %v982, %v978
    %v1159 = vpack.c.b16 %v987, %v983
    %v1160 = vpack.c.b16 %v988, %v984
    %v1161 = vpack.c.b16 %v989, %v985
    %v1162 = vpack.c.b16 %v990, %v986
    %v1163 = vpack.c.b16 %v995, %v991
    %v1164 = vpack.c.b16 %v996, %v992
    %v1165 = vpack.c.b16 %v997, %v993
    %v1166 = vpack.c.b16 %v998, %v994
    %v1167 = vpack.c.b16 %v1003, %v999
    %v1168 = vpack.c.b16 %v1004, %v1000
    %v1169 = vpack.c.b16 %v1005, %v1001
    %v1170 = vpack.c.b16 %v1006, %v1002
    %v1171 = vpack.c.b16 %v1011, %v1007
    %v1172 = vpack.c.b16 %v1012, %v1008
    %v1173 = vpack.c.b16 %v1013, %v1009
    %v1174 = vpack.c.b16 %v1014, %v1010
    %v1175 = vpack.c.b16 %v1019, %v1015
    %v1176 = vpack.c.b16 %v1020, %v1016
    %v1177 = vpack.c.b16 %v1021, %v1017
    %v1178 = vpack.c.b16 %v1022, %v1018
    %v1179 = vpack.c.b16 %v1027, %v1023
    %v1180 = vpack.c.b16 %v1028, %v1024
    %v1181 = vpack.c.b16 %v1029, %v1025
    %v1182 = vpack.c.b16 %v1030, %v1026
    %v1183 = vpack.c.b16 %v1035, %v1031
    %v1184 = vpack.c.b16 %v1036, %v1032
    %v1185 = vpack.c.b16 %v1037, %v1033
    %v1186 = vpack.c.b16 %v1038, %v1034
    %v1187 = vpack.c.b16 %v1043, %v1039
    %v1188 = vpack.c.b16 %v1044, %v1040
    %v1189 = vpack.c.b16 %v1045, %v1041
    %v1190 = vpack.c.b16 %v1046, %v1042
    %v1191 = vpack.c.b16 %v1051, %v1047
    %v1192 = vpack.c.b16 %v1052, %v1048
    %v1193 = vpack.c.b16 %v1053, %v1049
    %v1194 = vpack.c.b16 %v1054, %v1050
    %v1195 = vpack.c.b16 %v1059, %v1055
    %v1196 = vpack.c.b16 %v1060, %v1056
    %v1197 = vpack.c.b16 %v1061, %v1057
    %v1198 = vpack.c.b16 %v1062, %v1058
    %v1199 = vpack.c.b16 %v1067, %v1063
    %v1200 = vpack.c.b16 %v1068, %v1064
    %v1201 = vpack.c.b16 %v1069, %v1065
    %v1202 = vpack.c.b16 %v1070, %v1066
    %v1203 = vpack.c.b16 %v1075, %v1071
    %v1204 = vpack.c.b16 %v1076, %v1072
    %v1205 = vpack.c.b16 %v1077, %v1073
    %v1206 = vpack.c.b16 %v1078, %v1074
    %v1336 = vlaneseq
    %v1337 = vshrl.u32 %v1336, 7
    %v1338 = vsub.s32 0, %v1337
    %v1339 = vrot.slane %v694, %v1338
    %v1340 = vlaneseq
    %v1341 = vshrl.u32 %v1340, 7
    %v1342 = vsub.s32 1, %v1341
    %v1343 = vrot.slane %v694, %v1342
    %v1344 = vlaneseq
    %v1345 = vshrl.u32 %v1344, 7
    %v1346 = vsub.s32 2, %v1345
    %v1347 = vrot.slane %v694, %v1346
    %v1348 = vlaneseq
    %v1349 = vshrl.u32 %v1348, 7
    %v1350 = vsub.s32 3, %v1349
    %v1351 = vrot.slane %v694, %v1350
    %1356 = vmatprep.subr.bf16.mxu0 %v1080
    %1357 = vmatpush1.bf16.msra.mxu0 %v1079
    %1358 = vmatprep.subr.bf16.mxu0 %v1084
    %1359 = vmatpush1.bf16.msra.mxu0 %v1083
    %1360 = vmatprep.subr.bf16.mxu0 %v1088
    %1361 = vmatpush1.bf16.msra.mxu0 %v1087
    %1362 = vmatprep.subr.bf16.mxu0 %v1092
    %1363 = vmatpush1.bf16.msra.mxu0 %v1091
    %1364 = vmatprep.subr.bf16.mxu0 %v1096
    %1365 = vmatpush1.bf16.msra.mxu0 %v1095
    %1366 = vmatprep.subr.bf16.mxu0 %v1100
    %1367 = vmatpush1.bf16.msra.mxu0 %v1099
    %1368 = vmatprep.subr.bf16.mxu0 %v1104
    %1369 = vmatpush1.bf16.msra.mxu0 %v1103
    %1370 = vmatprep.subr.bf16.mxu0 %v1108
    %1371 = vmatpush1.bf16.msra.mxu0 %v1107
    %1372 = vmatprep.subr.bf16.mxu0 %v1112
    %1373 = vmatpush1.bf16.msra.mxu0 %v1111
    %1374 = vmatprep.subr.bf16.mxu0 %v1116
    %1375 = vmatpush1.bf16.msra.mxu0 %v1115
    %1376 = vmatprep.subr.bf16.mxu0 %v1120
    %1377 = vmatpush1.bf16.msra.mxu0 %v1119
    %1378 = vmatprep.subr.bf16.mxu0 %v1124
    %1379 = vmatpush1.bf16.msra.mxu0 %v1123
    %1380 = vmatprep.subr.bf16.mxu0 %v1128
    %1381 = vmatpush1.bf16.msra.mxu0 %v1127
    %1382 = vmatprep.subr.bf16.mxu0 %v1132
    %1383 = vmatpush1.bf16.msra.mxu0 %v1131
    %1384 = vmatprep.subr.bf16.mxu0 %v1136
    %1385 = vmatpush1.bf16.msra.mxu0 %v1135
    %1386 = vmatprep.subr.bf16.mxu0 %v1140
    %1387 = vmatpush1.bf16.msra.mxu0 %v1139
    %1388 = vmatprep.mubr.bf16.mxu0 %v563
    %1389 = vmatmul.mubr.bf16.gmra.mrb[0].mxu0 %v562
    %v1390 = vpop.f32.mrb[0].mxu0
    %v1391 = vadd.f32 %v1339, %v1390
    %v1392 = vpop.f32.mrb[0].mxu0
    %v1393 = vadd.f32 %v1343, %v1392
    %v1394 = vpop.f32.mrb[0].mxu0
    %v1395 = vpop.f32.mrb[0].mxu0
    %1396 = vdwg.mxu0
    %1397 = vmatprep.subr.bf16.mxu0 %v1144
    %1398 = vmatpush1.bf16.msra.mxu0 %v1143
    %1399 = vmatprep.subr.bf16.mxu0 %v1148
    %1400 = vmatpush1.bf16.msra.mxu0 %v1147
    %1401 = vmatprep.subr.bf16.mxu0 %v1152
    %1402 = vmatpush1.bf16.msra.mxu0 %v1151
    %1403 = vmatprep.subr.bf16.mxu0 %v1156
    %1404 = vmatpush1.bf16.msra.mxu0 %v1155
    %1405 = vmatprep.subr.bf16.mxu0 %v1160
    %1406 = vmatpush1.bf16.msra.mxu0 %v1159
    %1407 = vmatprep.subr.bf16.mxu0 %v1164
    %1408 = vmatpush1.bf16.msra.mxu0 %v1163
    %1409 = vmatprep.subr.bf16.mxu0 %v1168
    %1410 = vmatpush1.bf16.msra.mxu0 %v1167
    %1411 = vmatprep.subr.bf16.mxu0 %v1172
    %1412 = vmatpush1.bf16.msra.mxu0 %v1171
    %1413 = vmatprep.subr.bf16.mxu0 %v1176
    %1414 = vmatpush1.bf16.msra.mxu0 %v1175
    %1415 = vmatprep.subr.bf16.mxu0 %v1180
    %1416 = vmatpush1.bf16.msra.mxu0 %v1179
    %1417 = vmatprep.subr.bf16.mxu0 %v1184
    %1418 = vmatpush1.bf16.msra.mxu0 %v1183
    %1419 = vmatprep.subr.bf16.mxu0 %v1188
    %1420 = vmatpush1.bf16.msra.mxu0 %v1187
    %1421 = vmatprep.subr.bf16.mxu0 %v1192
    %1422 = vmatpush1.bf16.msra.mxu0 %v1191
    %1423 = vmatprep.subr.bf16.mxu0 %v1196
    %1424 = vmatpush1.bf16.msra.mxu0 %v1195
    %1425 = vmatprep.subr.bf16.mxu0 %v1200
    %1426 = vmatpush1.bf16.msra.mxu0 %v1199
    %1427 = vmatprep.subr.bf16.mxu0 %v1204
    %1428 = vmatpush1.bf16.msra.mxu0 %v1203
    %1429 = vmatprep.mubr.bf16.mxu0 %v565
    %1430 = vmatmul.mubr.bf16.gmra.mrb[0].mxu0 %v564
    %v1431 = vpop.f32.mrb[0].mxu0
    %v1432 = vadd.f32 %v1391, %v1431
    %v1433 = vpop.f32.mrb[0].mxu0
    %v1434 = vadd.f32 %v1393, %v1433
    %v1435 = vpop.f32.mrb[0].mxu0
    %v1436 = vpop.f32.mrb[0].mxu0
    %1437 = vdwg.mxu0
    %1438 = vmatprep.subr.bf16.mxu0 %v1082
    %1439 = vmatpush1.bf16.msra.mxu0 %v1081
    %1440 = vmatprep.subr.bf16.mxu0 %v1086
    %1441 = vmatpush1.bf16.msra.mxu0 %v1085
    %1442 = vmatprep.subr.bf16.mxu0 %v1090
    %1443 = vmatpush1.bf16.msra.mxu0 %v1089
    %1444 = vmatprep.subr.bf16.mxu0 %v1094
    %1445 = vmatpush1.bf16.msra.mxu0 %v1093
    %1446 = vmatprep.subr.bf16.mxu0 %v1098
    %1447 = vmatpush1.bf16.msra.mxu0 %v1097
    %1448 = vmatprep.subr.bf16.mxu0 %v1102
    %1449 = vmatpush1.bf16.msra.mxu0 %v1101
    %1450 = vmatprep.subr.bf16.mxu0 %v1106
    %1451 = vmatpush1.bf16.msra.mxu0 %v1105
    %1452 = vmatprep.subr.bf16.mxu0 %v1110
    %1453 = vmatpush1.bf16.msra.mxu0 %v1109
    %1454 = vmatprep.subr.bf16.mxu0 %v1114
    %1455 = vmatpush1.bf16.msra.mxu0 %v1113
    %1456 = vmatprep.subr.bf16.mxu0 %v1118
    %1457 = vmatpush1.bf16.msra.mxu0 %v1117
    %1458 = vmatprep.subr.bf16.mxu0 %v1122
    %1459 = vmatpush1.bf16.msra.mxu0 %v1121
    %1460 = vmatprep.subr.bf16.mxu0 %v1126
    %1461 = vmatpush1.bf16.msra.mxu0 %v1125
    %1462 = vmatprep.subr.bf16.mxu0 %v1130
    %1463 = vmatpush1.bf16.msra.mxu0 %v1129
    %1464 = vmatprep.subr.bf16.mxu0 %v1134
    %1465 = vmatpush1.bf16.msra.mxu0 %v1133
    %1466 = vmatprep.subr.bf16.mxu0 %v1138
    %1467 = vmatpush1.bf16.msra.mxu0 %v1137
    %1468 = vmatprep.subr.bf16.mxu0 %v1142
    %1469 = vmatpush1.bf16.msra.mxu0 %v1141
    %1470 = vmatprep.mubr.bf16.mxu0 %v563
    %1471 = vmatmul.mubr.bf16.gmra.mrb[0].mxu0 %v562
    %v1472 = vpop.f32.mrb[0].mxu0
    %v1473 = vadd.f32 %v1347, %v1472
    %v1474 = vpop.f32.mrb[0].mxu0
    %v1475 = vadd.f32 %v1351, %v1474
    %v1476 = vpop.f32.mrb[0].mxu0
    %v1477 = vpop.f32.mrb[0].mxu0
    %1478 = vdwg.mxu0
    %1479 = vmatprep.subr.bf16.mxu0 %v1146
    %1480 = vmatpush1.bf16.msra.mxu0 %v1145
    %1481 = vmatprep.subr.bf16.mxu0 %v1150
    %1482 = vmatpush1.bf16.msra.mxu0 %v1149
    %1483 = vmatprep.subr.bf16.mxu0 %v1154
    %1484 = vmatpush1.bf16.msra.mxu0 %v1153
    %1485 = vmatprep.subr.bf16.mxu0 %v1158
    %1486 = vmatpush1.bf16.msra.mxu0 %v1157
    %1487 = vmatprep.subr.bf16.mxu0 %v1162
    %1488 = vmatpush1.bf16.msra.mxu0 %v1161
    %1489 = vmatprep.subr.bf16.mxu0 %v1166
    %1490 = vmatpush1.bf16.msra.mxu0 %v1165
    %1491 = vmatprep.subr.bf16.mxu0 %v1170
    %1492 = vmatpush1.bf16.msra.mxu0 %v1169
    %1493 = vmatprep.subr.bf16.mxu0 %v1174
    %1494 = vmatpush1.bf16.msra.mxu0 %v1173
    %1495 = vmatprep.subr.bf16.mxu0 %v1178
    %1496 = vmatpush1.bf16.msra.mxu0 %v1177
    %1497 = vmatprep.subr.bf16.mxu0 %v1182
    %1498 = vmatpush1.bf16.msra.mxu0 %v1181
    %1499 = vmatprep.subr.bf16.mxu0 %v1186
    %1500 = vmatpush1.bf16.msra.mxu0 %v1185
    %1501 = vmatprep.subr.bf16.mxu0 %v1190
    %1502 = vmatpush1.bf16.msra.mxu0 %v1189
    %1503 = vmatprep.subr.bf16.mxu0 %v1194
    %1504 = vmatpush1.bf16.msra.mxu0 %v1193
    %1505 = vmatprep.subr.bf16.mxu0 %v1198
    %1506 = vmatpush1.bf16.msra.mxu0 %v1197
    %1507 = vmatprep.subr.bf16.mxu0 %v1202
    %1508 = vmatpush1.bf16.msra.mxu0 %v1201
    %1509 = vmatprep.subr.bf16.mxu0 %v1206
    %1510 = vmatpush1.bf16.msra.mxu0 %v1205
    %1511 = vmatprep.mubr.bf16.mxu0 %v565
    %1512 = vmatmul.mubr.bf16.gmra.mrb[0].mxu0 %v564
    %v1513 = vpop.f32.mrb[0].mxu0
    %v1514 = vadd.f32 %v1473, %v1513
    %v1515 = vpop.f32.mrb[0].mxu0
    %v1516 = vadd.f32 %v1475, %v1515
    %v1517 = vpop.f32.mrb[0].mxu0
    %v1518 = vpop.f32.mrb[0].mxu0
    %1519 = vdwg.mxu0
    %v1520 = vmax.f32 %v1432, 0.0
    %v1521 = vmax.f32 %v1434, 0.0
    %v1522 = vmax.f32 %v1514, 0.0
    %v1523 = vmax.f32 %v1516, 0.0
    %v1524 = vpack.c.bf16 %v1520, %v1520
    %v1525 = vpack.c.bf16 %v1521, %v1521
    %v1526 = vpack.c.bf16 %v1522, %v1522
    %v1527 = vpack.c.bf16 %v1523, %v1523
    %v1528 = vld [vmem:[%s5] sm:$0xf]
    %v1529 = vld [vmem:[%s5 + $0x4] sm:$0xf]
    %v1530 = vld [vmem:[%s5 + $0x8] sm:$0xf]
    %v1531 = vld [vmem:[%s5 + $0xc] sm:$0xf]
    %v1532 = vld [vmem:[%s5 + $0x10] sm:$0xf]
    %v1533 = vld [vmem:[%s5 + $0x14] sm:$0xf]
    %v1534 = vld [vmem:[%s5 + $0x18] sm:$0xf]
    %v1535 = vld [vmem:[%s5 + $0x1c] sm:$0xf]
    %v1536 = vld [vmem:[%s5 + $0x20] sm:$0xf]
    %v1537 = vld [vmem:[%s5 + $0x24] sm:$0xf]
    %v1538 = vld [vmem:[%s5 + $0x28] sm:$0xf]
    %v1539 = vld [vmem:[%s5 + $0x2c] sm:$0xf]
    %v1540 = vld [vmem:[%s5 + $0x30] sm:$0xf]
    %v1541 = vld [vmem:[%s5 + $0x34] sm:$0xf]
    %v1542 = vld [vmem:[%s5 + $0x38] sm:$0xf]
    %v1543 = vld [vmem:[%s5 + $0x3c] sm:$0xf]
    %v1544 = vld [vmem:[%s5 + $0x40] sm:$0xf]
    %v1545 = vld [vmem:[%s5 + $0x44] sm:$0xf]
    %v1546 = vld [vmem:[%s5 + $0x48] sm:$0xf]
    %v1547 = vld [vmem:[%s5 + $0x4c] sm:$0xf]
    %v1548 = vld [vmem:[%s5 + $0x50] sm:$0xf]
    %v1549 = vld [vmem:[%s5 + $0x54] sm:$0xf]
    %v1550 = vld [vmem:[%s5 + $0x58] sm:$0xf]
    %v1551 = vld [vmem:[%s5 + $0x5c] sm:$0xf]
    %v1552 = vld [vmem:[%s5 + $0x60] sm:$0xf]
    %v1553 = vld [vmem:[%s5 + $0x64] sm:$0xf]
    %v1554 = vld [vmem:[%s5 + $0x68] sm:$0xf]
    %v1555 = vld [vmem:[%s5 + $0x6c] sm:$0xf]
    %v1556 = vld [vmem:[%s5 + $0x70] sm:$0xf]
    %v1557 = vld [vmem:[%s5 + $0x74] sm:$0xf]
    %v1558 = vld [vmem:[%s5 + $0x78] sm:$0xf]
    %v1559 = vld [vmem:[%s5 + $0x7c] sm:$0xf]
    %v1560 = vld [vmem:[%s5 + $0x80] sm:$0xf]
    %v1561 = vld [vmem:[%s5 + $0x84] sm:$0xf]
    %v1562 = vld [vmem:[%s5 + $0x88] sm:$0xf]
    %v1563 = vld [vmem:[%s5 + $0x8c] sm:$0xf]
    %v1564 = vld [vmem:[%s5 + $0x90] sm:$0xf]
    %v1565 = vld [vmem:[%s5 + $0x94] sm:$0xf]
    %v1566 = vld [vmem:[%s5 + $0x98] sm:$0xf]
    %v1567 = vld [vmem:[%s5 + $0x9c] sm:$0xf]
    %v1568 = vld [vmem:[%s5 + $0xa0] sm:$0xf]
    %v1569 = vld [vmem:[%s5 + $0xa4] sm:$0xf]
    %v1570 = vld [vmem:[%s5 + $0xa8] sm:$0xf]
    %v1571 = vld [vmem:[%s5 + $0xac] sm:$0xf]
    %v1572 = vld [vmem:[%s5 + $0xb0] sm:$0xf]
    %v1573 = vld [vmem:[%s5 + $0xb4] sm:$0xf]
    %v1574 = vld [vmem:[%s5 + $0xb8] sm:$0xf]
    %v1575 = vld [vmem:[%s5 + $0xbc] sm:$0xf]
    %v1576 = vld [vmem:[%s5 + $0xc0] sm:$0xf]
    %v1577 = vld [vmem:[%s5 + $0xc4] sm:$0xf]
    %v1578 = vld [vmem:[%s5 + $0xc8] sm:$0xf]
    %v1579 = vld [vmem:[%s5 + $0xcc] sm:$0xf]
    %v1580 = vld [vmem:[%s5 + $0xd0] sm:$0xf]
    %v1581 = vld [vmem:[%s5 + $0xd4] sm:$0xf]
    %v1582 = vld [vmem:[%s5 + $0xd8] sm:$0xf]
    %v1583 = vld [vmem:[%s5 + $0xdc] sm:$0xf]
    %v1584 = vld [vmem:[%s5 + $0xe0] sm:$0xf]
    %v1585 = vld [vmem:[%s5 + $0xe4] sm:$0xf]
    %v1586 = vld [vmem:[%s5 + $0xe8] sm:$0xf]
    %v1587 = vld [vmem:[%s5 + $0xec] sm:$0xf]
    %v1588 = vld [vmem:[%s5 + $0xf0] sm:$0xf]
    %v1589 = vld [vmem:[%s5 + $0xf4] sm:$0xf]
    %v1590 = vld [vmem:[%s5 + $0xf8] sm:$0xf]
    %v1591 = vld [vmem:[%s5 + $0xfc] sm:$0xf]
    %v1592 = vld [vmem:[%s6] sm:$0x1]
    %v1657 = vunpack.c.l.b16 %v1528
    %v1658 = vunpack.c.l.b16 %v1529
    %v1659 = vunpack.c.l.b16 %v1530
    %v1660 = vunpack.c.l.b16 %v1531
    %v1661 = vunpack.c.l.b16 %v1532
    %v1662 = vunpack.c.l.b16 %v1533
    %v1663 = vunpack.c.l.b16 %v1534
    %v1664 = vunpack.c.l.b16 %v1535
    %v1665 = vunpack.c.l.b16 %v1536
    %v1666 = vunpack.c.l.b16 %v1537
    %v1667 = vunpack.c.l.b16 %v1538
    %v1668 = vunpack.c.l.b16 %v1539
    %v1669 = vunpack.c.l.b16 %v1540
    %v1670 = vunpack.c.l.b16 %v1541
    %v1671 = vunpack.c.l.b16 %v1542
    %v1672 = vunpack.c.l.b16 %v1543
    %v1673 = vunpack.c.l.b16 %v1544
    %v1674 = vunpack.c.l.b16 %v1545
    %v1675 = vunpack.c.l.b16 %v1546
    %v1676 = vunpack.c.l.b16 %v1547
    %v1677 = vunpack.c.l.b16 %v1548
    %v1678 = vunpack.c.l.b16 %v1549
    %v1679 = vunpack.c.l.b16 %v1550
    %v1680 = vunpack.c.l.b16 %v1551
    %v1681 = vunpack.c.l.b16 %v1552
    %v1682 = vunpack.c.l.b16 %v1553
    %v1683 = vunpack.c.l.b16 %v1554
    %v1684 = vunpack.c.l.b16 %v1555
    %v1685 = vunpack.c.l.b16 %v1556
    %v1686 = vunpack.c.l.b16 %v1557
    %v1687 = vunpack.c.l.b16 %v1558
    %v1688 = vunpack.c.l.b16 %v1559
    %v1689 = vunpack.c.l.b16 %v1560
    %v1690 = vunpack.c.l.b16 %v1561
    %v1691 = vunpack.c.l.b16 %v1562
    %v1692 = vunpack.c.l.b16 %v1563
    %v1693 = vunpack.c.l.b16 %v1564
    %v1694 = vunpack.c.l.b16 %v1565
    %v1695 = vunpack.c.l.b16 %v1566
    %v1696 = vunpack.c.l.b16 %v1567
    %v1697 = vunpack.c.l.b16 %v1568
    %v1698 = vunpack.c.l.b16 %v1569
    %v1699 = vunpack.c.l.b16 %v1570
    %v1700 = vunpack.c.l.b16 %v1571
    %v1701 = vunpack.c.l.b16 %v1572
    %v1702 = vunpack.c.l.b16 %v1573
    %v1703 = vunpack.c.l.b16 %v1574
    %v1704 = vunpack.c.l.b16 %v1575
    %v1705 = vunpack.c.l.b16 %v1576
    %v1706 = vunpack.c.l.b16 %v1577
    %v1707 = vunpack.c.l.b16 %v1578
    %v1708 = vunpack.c.l.b16 %v1579
    %v1709 = vunpack.c.l.b16 %v1580
    %v1710 = vunpack.c.l.b16 %v1581
    %v1711 = vunpack.c.l.b16 %v1582
    %v1712 = vunpack.c.l.b16 %v1583
    %v1713 = vunpack.c.l.b16 %v1584
    %v1714 = vunpack.c.l.b16 %v1585
    %v1715 = vunpack.c.l.b16 %v1586
    %v1716 = vunpack.c.l.b16 %v1587
    %v1717 = vunpack.c.l.b16 %v1588
    %v1718 = vunpack.c.l.b16 %v1589
    %v1719 = vunpack.c.l.b16 %v1590
    %v1720 = vunpack.c.l.b16 %v1591
    %v1721 = vpack.c.b16 %v1658, %v1657
    %v1722 = vpack.c.b16 %v1660, %v1659
    %v1723 = vpack.c.b16 %v1662, %v1661
    %v1724 = vpack.c.b16 %v1664, %v1663
    %v1725 = vpack.c.b16 %v1666, %v1665
    %v1726 = vpack.c.b16 %v1668, %v1667
    %v1727 = vpack.c.b16 %v1670, %v1669
    %v1728 = vpack.c.b16 %v1672, %v1671
    %v1729 = vpack.c.b16 %v1674, %v1673
    %v1730 = vpack.c.b16 %v1676, %v1675
    %v1731 = vpack.c.b16 %v1678, %v1677
    %v1732 = vpack.c.b16 %v1680, %v1679
    %v1733 = vpack.c.b16 %v1682, %v1681
    %v1734 = vpack.c.b16 %v1684, %v1683
    %v1735 = vpack.c.b16 %v1686, %v1685
    %v1736 = vpack.c.b16 %v1688, %v1687
    %v1737 = vpack.c.b16 %v1690, %v1689
    %v1738 = vpack.c.b16 %v1692, %v1691
    %v1739 = vpack.c.b16 %v1694, %v1693
    %v1740 = vpack.c.b16 %v1696, %v1695
    %v1741 = vpack.c.b16 %v1698, %v1697
    %v1742 = vpack.c.b16 %v1700, %v1699
    %v1743 = vpack.c.b16 %v1702, %v1701
    %v1744 = vpack.c.b16 %v1704, %v1703
    %v1745 = vpack.c.b16 %v1706, %v1705
    %v1746 = vpack.c.b16 %v1708, %v1707
    %v1747 = vpack.c.b16 %v1710, %v1709
    %v1748 = vpack.c.b16 %v1712, %v1711
    %v1749 = vpack.c.b16 %v1714, %v1713
    %v1750 = vpack.c.b16 %v1716, %v1715
    %v1751 = vpack.c.b16 %v1718, %v1717
    %v1752 = vpack.c.b16 %v1720, %v1719
    %1785 = vmatprep.subr.bf16.mxu0 0
    %1786 = vmatpush1.bf16.msra.mxu0 %v1721
    %1787 = vmatprep.subr.bf16.mxu0 0
    %1788 = vmatpush1.bf16.msra.mxu0 %v1722
    %1789 = vmatprep.subr.bf16.mxu0 0
    %1790 = vmatpush1.bf16.msra.mxu0 %v1723
    %1791 = vmatprep.subr.bf16.mxu0 0
    %1792 = vmatpush1.bf16.msra.mxu0 %v1724
    %1793 = vmatprep.subr.bf16.mxu0 0
    %1794 = vmatpush1.bf16.msra.mxu0 %v1725
    %1795 = vmatprep.subr.bf16.mxu0 0
    %1796 = vmatpush1.bf16.msra.mxu0 %v1726
    %1797 = vmatprep.subr.bf16.mxu0 0
    %1798 = vmatpush1.bf16.msra.mxu0 %v1727
    %1799 = vmatprep.subr.bf16.mxu0 0
    %1800 = vmatpush1.bf16.msra.mxu0 %v1728
    %1801 = vmatprep.subr.bf16.mxu0 0
    %1802 = vmatpush1.bf16.msra.mxu0 %v1729
    %1803 = vmatprep.subr.bf16.mxu0 0
    %1804 = vmatpush1.bf16.msra.mxu0 %v1730
    %1805 = vmatprep.subr.bf16.mxu0 0
    %1806 = vmatpush1.bf16.msra.mxu0 %v1731
    %1807 = vmatprep.subr.bf16.mxu0 0
    %1808 = vmatpush1.bf16.msra.mxu0 %v1732
    %1809 = vmatprep.subr.bf16.mxu0 0
    %1810 = vmatpush1.bf16.msra.mxu0 %v1733
    %1811 = vmatprep.subr.bf16.mxu0 0
    %1812 = vmatpush1.bf16.msra.mxu0 %v1734
    %1813 = vmatprep.subr.bf16.mxu0 0
    %1814 = vmatpush1.bf16.msra.mxu0 %v1735
    %1815 = vmatprep.subr.bf16.mxu0 0
    %1816 = vmatpush1.bf16.msra.mxu0 %v1736
    %1817 = vmatprep.mubr.bf16.mxu0 %v1525
    %1818 = vmatmul.mubr.bf16.gmra.mrb[0].mxu0 %v1524
    %v1819 = vpop.f32.mrb[0].mxu0
    %v1820 = vadd.f32 %v1592, %v1819
    %v1821 = vpop.f32.mrb[0].mxu0
    %v1822 = vpop.f32.mrb[0].mxu0
    %v1823 = vpop.f32.mrb[0].mxu0
    %1824 = vdwg.mxu0
    %1825 = vmatprep.subr.bf16.mxu0 0
    %1826 = vmatpush1.bf16.msra.mxu0 %v1737
    %1827 = vmatprep.subr.bf16.mxu0 0
    %1828 = vmatpush1.bf16.msra.mxu0 %v1738
    %1829 = vmatprep.subr.bf16.mxu0 0
    %1830 = vmatpush1.bf16.msra.mxu0 %v1739
    %1831 = vmatprep.subr.bf16.mxu0 0
    %1832 = vmatpush1.bf16.msra.mxu0 %v1740
    %1833 = vmatprep.subr.bf16.mxu0 0
    %1834 = vmatpush1.bf16.msra.mxu0 %v1741
    %1835 = vmatprep.subr.bf16.mxu0 0
    %1836 = vmatpush1.bf16.msra.mxu0 %v1742
    %1837 = vmatprep.subr.bf16.mxu0 0
    %1838 = vmatpush1.bf16.msra.mxu0 %v1743
    %1839 = vmatprep.subr.bf16.mxu0 0
    %1840 = vmatpush1.bf16.msra.mxu0 %v1744
    %1841 = vmatprep.subr.bf16.mxu0 0
    %1842 = vmatpush1.bf16.msra.mxu0 %v1745
    %1843 = vmatprep.subr.bf16.mxu0 0
    %1844 = vmatpush1.bf16.msra.mxu0 %v1746
    %1845 = vmatprep.subr.bf16.mxu0 0
    %1846 = vmatpush1.bf16.msra.mxu0 %v1747
    %1847 = vmatprep.subr.bf16.mxu0 0
    %1848 = vmatpush1.bf16.msra.mxu0 %v1748
    %1849 = vmatprep.subr.bf16.mxu0 0
    %1850 = vmatpush1.bf16.msra.mxu0 %v1749
    %1851 = vmatprep.subr.bf16.mxu0 0
    %1852 = vmatpush1.bf16.msra.mxu0 %v1750
    %1853 = vmatprep.subr.bf16.mxu0 0
    %1854 = vmatpush1.bf16.msra.mxu0 %v1751
    %1855 = vmatprep.subr.bf16.mxu0 0
    %1856 = vmatpush1.bf16.msra.mxu0 %v1752
    %1857 = vmatprep.mubr.bf16.mxu0 %v1527
    %1858 = vmatmul.mubr.bf16.gmra.mrb[0].mxu0 %v1526
    %v1859 = vpop.f32.mrb[0].mxu0
    %v1860 = vadd.f32 %v1820, %v1859
    %v1861 = vpop.f32.mrb[0].mxu0
    %v1862 = vpop.f32.mrb[0].mxu0
    %v1863 = vpop.f32.mrb[0].mxu0
    %1864 = vdwg.mxu0
    %v1865 = vtanh.pop %v1860
    %vm1866 = vcmask 57344
    %1867 = vst.msk [vmem:[#allocation7] sm:$0x1] %vm1866, %v1865
    // Predicated region
    $region38: #{tpu_custom_call.1} parent=1 // pred_check
      _
    $region39: #{tpu_custom_call.1} parent=1 // pred_check_branch
      %1869 = sbr.rel (0) target = $region41
    $region40: #{tpu_custom_call.1} parent=1 // pred_region
      %s1871 = ssub.s32 16, 16
      %1872 = vsyncadd [#allocation4], %s1871
      %s1874 = sshll.u32 [#allocation7], 4
      %s1875 = int_to_ptr.vmem [resolvable:$true] %s1874
      %1877 = dma.vmem_to_hbm [thread:$0]  %s1875, 16, %s7, [#allocation4]
    $region41: #{tpu_custom_call.1} parent=1 // pred_fallthru
      _
    // Predicated region
    $region42: #{tpu_custom_call.1} parent=1 // pred_check
      _
    $region43: #{tpu_custom_call.1} parent=1 // pred_check_branch
      %1879 = sbr.rel (0) target = $region45
    $region44: #{tpu_custom_call.1} parent=1 // pred_region
      %1880 = dma.done [#allocation4], 16
    $region45: #{tpu_custom_call.1} parent=1 // pred_fallthru
      _
    %1881 = vsyncpa [#allocation3], 1
    %1882 = vsyncpa [#allocation6], 1
    %1883 = vsyncpa [#allocation4], 1

</llo_original>
